<compile_context>
chip_gen: v5e
topology: v5e:2x2
jax: 0.10.0
libtpu: 0.0.40
codegen_flags: <defaults>
</compile_context>

<pallas_src>
import jax
import jax.numpy as jnp
from jax import lax
from jax.experimental import pallas as pl
from jax.experimental.pallas import tpu as pltpu

EXPANSION = 4
BN_EPS = 1e-5


# --------------------------------------------------------------------------
# Per-generation VMEM budget / tile targets
# --------------------------------------------------------------------------
def _vmem_capacity_bytes():
    try:
        info = pltpu.get_tpu_info()
        cap = getattr(info, "vmem_capacity_bytes", None)
        if cap:
            return int(cap)
    except Exception:
        pass
    return 64 * 1024 * 1024          # conservative: assume v7x-sized VMEM


def _budget():
    cap = _vmem_capacity_bytes()
    if cap >= 100 * 1024 * 1024:     # v5e / v6e: 128 MiB VMEM per TensorCore
        return 96 * 1024 * 1024, 1024
    return 48 * 1024 * 1024, 512     # v7x: 64 MiB per TensorCore


def _pick_l_tile(L, target):
    """Largest 128-multiple <= target dividing L, else the full extent."""
    if L <= target:
        return L
    t = (min(target, L) // 128) * 128
    while t >= 128:
        if L % t == 0:
            return t
        t -= 128
    return L   # TODO(synk): pad L + mask instead of a full-extent fallback.


# --------------------------------------------------------------------------
# Kernels (all activations channel-major: (channels, L-tile))
# --------------------------------------------------------------------------
def _conv1_stats_kernel(x_ref, w_ref, h_ref, s_ref, ss_ref):
    """1x1 conv (channel matmul) + per-tile BN1 sum / sumsq partials."""
    h = jnp.dot(w_ref[...], x_ref[0].astype(jnp.bfloat16),
                preferred_element_type=jnp.float32)            # (C, TL) f32
    h_ref[0] = h.astype(jnp.bfloat16)                          # bf16 to HBM
    s_ref[0] = jnp.sum(h, axis=1, keepdims=True)               # f32 stats
    ss_ref[0] = jnp.sum(h * h, axis=1, keepdims=True)


def _bn_relu_conv3_stats_kernel(h_ref, scale_ref, shift_ref, w_ref,
                                o_ref, s_ref, ss_ref):
    """BN1-apply + ReLU + conv2 (k=3, pad=1, stride=1) + per-batch BN2 stats.

    out[:, l] = w2[0]@a[:, l-1] + w2[1]@a[:, l] + w2[2]@a[:, l+1]
    The three taps are matmuls on the unshifted activation; the +-1 lane
    shifts are built by prepending/appending a single zero column to the tap
    outputs (one lane-offset copy each, no halo scratch, no (L,3C) im2col).
    """
    L = h_ref.shape[2]
    a = jnp.maximum(h_ref[0].astype(jnp.float32) * scale_ref[...]
                    + shift_ref[...], 0.0)                     # (C, L) f32
    ab = a.astype(jnp.bfloat16)

    h_left = jnp.dot(w_ref[0], ab, preferred_element_type=jnp.float32)
    h_mid = jnp.dot(w_ref[1], ab, preferred_element_type=jnp.float32)
    h_right = jnp.dot(w_ref[2], ab, preferred_element_type=jnp.float32)

    zero_col = jnp.zeros((h_mid.shape[0], 1), jnp.float32)
    left = jnp.concatenate([zero_col, h_left[:, :L - 1]], axis=1)   # a[l-1]
    right = jnp.concatenate([h_right[:, 1:], zero_col], axis=1)     # a[l+1]
    h2 = h_mid + left + right                                       # (C, L)

    o_ref[0] = h2.astype(jnp.bfloat16)
    s_ref[0] = jnp.sum(h2, axis=1, keepdims=True)
    ss_ref[0] = jnp.sum(h2 * h2, axis=1, keepdims=True)


def _bn_relu_conv_stats_kernel(h_ref, scale_ref, shift_ref, w_ref,
                               o_ref, s_ref, ss_ref):
    """BN2-apply + ReLU + 1x1 conv (expansion) + per-tile BN3 stats."""
    a = jnp.maximum(h_ref[0].astype(jnp.float32) * scale_ref[...]
                    + shift_ref[...], 0.0)
    o = jnp.dot(w_ref[...], a.astype(jnp.bfloat16),
                preferred_element_type=jnp.float32)            # (Cexp, TL) f32
    o_ref[0] = o.astype(jnp.bfloat16)
    s_ref[0] = jnp.sum(o, axis=1, keepdims=True)
    ss_ref[0] = jnp.sum(o * o, axis=1, keepdims=True)


def _bn_residual_relu_kernel(h_ref, x_ref, scale_ref, shift_ref, o_ref):
    """BN3-apply + identity residual add + final ReLU (pure VPU)."""
    z = (h_ref[0].astype(jnp.float32) * scale_ref[...] + shift_ref[...]
         + x_ref[0])
    o_ref[0] = jnp.maximum(z, 0.0)


# --------------------------------------------------------------------------
# Wrapper
# --------------------------------------------------------------------------
def _bn_fold(s_partials, ss_partials, gamma, beta, n):
    """Reduce per-tile (sum, sumsq) partials -> per-channel scale/shift cols."""
    s = jnp.sum(s_partials, axis=0)                            # (C, 1)
    ss = jnp.sum(ss_partials, axis=0)                          # (C, 1)
    mean = s / n
    var = jnp.maximum(ss / n - mean * mean, 0.0)               # biased variance
    # TODO(synk): for very large B*L switch to per-tile (count, mean, M2)
    # partials to avoid E[x^2]-E[x]^2 cancellation.
    scale = gamma.reshape(-1, 1) * lax.rsqrt(var + BN_EPS)
    shift = beta.reshape(-1, 1) - mean * scale
    return scale.astype(jnp.float32), shift.astype(jnp.float32)


def bottleneck_forward(x_ncl, params):
    """x_ncl: (B, Cin, L) float32, PyTorch NCL layout (kept end-to-end)."""
    x = x_ncl.astype(jnp.float32)
    B, Cin, L = x.shape
    C = params['w1'].shape[0]
    Cexp = params['w3'].shape[0]
    assert Cexp == Cin, "identity residual requires in_channels == out_channels*4"

    vmem_limit, tl_target = _budget()
    TL = _pick_l_tile(L, tl_target)
    nL = L // TL
    nT = B * nL
    M = B * L
    n = float(M)

    cp1 = pltpu.CompilerParams(dimension_semantics=("parallel",),
                               vmem_limit_bytes=vmem_limit)
    cp2 = pltpu.CompilerParams(dimension_semantics=("parallel", "parallel"),
                               vmem_limit_bytes=vmem_limit)

    # Pre-cast conv weights to bf16 once (resident blocks, no per-step casts).
    w1 = params['w1'].astype(jnp.bfloat16)        # (C,    Cin)
    w2 = params['w2'].astype(jnp.bfloat16)        # (3, C, C)
    w3 = params['w3'].astype(jnp.bfloat16)        # (Cexp, C)

    # ---- stage 1: conv1 (1x1) + BN1 batch statistics -----------------------
    h1, s1, ss1 = pl.pallas_call(
        _conv1_stats_kernel,
        grid=(B, nL),
        in_specs=[pl.BlockSpec((1, Cin, TL), lambda b, j: (b, 0, j)),
                  pl.BlockSpec((C, Cin), lambda b, j: (0, 0))],
        out_specs=[pl.BlockSpec((1, C, TL), lambda b, j: (b, 0, j)),
                   pl.BlockSpec((1, C, 1), lambda b, j: (b * nL + j, 0, 0)),
                   pl.BlockSpec((1, C, 1), lambda b, j: (b * nL + j, 0, 0))],
        out_shape=(jax.ShapeDtypeStruct((B, C, L), jnp.bfloat16),
                   jax.ShapeDtypeStruct((nT, C, 1), jnp.float32),
                   jax.ShapeDtypeStruct((nT, C, 1), jnp.float32)),
        compiler_params=cp2,
        cost_estimate=pl.CostEstimate(
            flops=2 * M * Cin * C, transcendentals=0,
            bytes_accessed=4 * M * Cin + 2 * (Cin * C + M * C) + 8 * nT * C),
    )(x, w1)
    scale1, shift1 = _bn_fold(s1, ss1, params['g1'], params['b1'], n)

    # ---- stage 2: BN1 + ReLU + conv2 (k=3, pad=1) + BN2 statistics ---------
    h2, s2, ss2 = pl.pallas_call(
        _bn_relu_conv3_stats_kernel,
        grid=(B,),
        in_specs=[pl.BlockSpec((1, C, L), lambda b: (b, 0, 0)),
                  pl.BlockSpec((C, 1), lambda b: (0, 0)),
                  pl.BlockSpec((C, 1), lambda b: (0, 0)),
                  pl.BlockSpec((3, C, C), lambda b: (0, 0, 0))],
        out_specs=[pl.BlockSpec((1, C, L), lambda b: (b, 0, 0)),
                   pl.BlockSpec((1, C, 1), lambda b: (b, 0, 0)),
                   pl.BlockSpec((1, C, 1), lambda b: (b, 0, 0))],
        out_shape=(jax.ShapeDtypeStruct((B, C, L), jnp.bfloat16),
                   jax.ShapeDtypeStruct((B, C, 1), jnp.float32),
                   jax.ShapeDtypeStruct((B, C, 1), jnp.float32)),
        compiler_params=cp1,
        cost_estimate=pl.CostEstimate(
            flops=2 * M * 3 * C * C, transcendentals=0,
            bytes_accessed=2 * (2 * M * C + 3 * C * C) + 8 * (B + 1) * C),
    )(h1, scale1, shift1, w2)
    scale2, shift2 = _bn_fold(s2, ss2, params['g2'], params['b2'], n)

    # ---- stage 3: BN2 + ReLU + conv3 (1x1, expansion) + BN3 statistics -----
    h3, s3, ss3 = pl.pallas_call(
        _bn_relu_conv_stats_kernel,
        grid=(B, nL),
        in_specs=[pl.BlockSpec((1, C, TL), lambda b, j: (b, 0, j)),
                  pl.BlockSpec((C, 1), lambda b, j: (0, 0)),
                  pl.BlockSpec((C, 1), lambda b, j: (0, 0)),
                  pl.BlockSpec((Cexp, C), lambda b, j: (0, 0))],
        out_specs=[pl.BlockSpec((1, Cexp, TL), lambda b, j: (b, 0, j)),
                   pl.BlockSpec((1, Cexp, 1), lambda b, j: (b * nL + j, 0, 0)),
                   pl.BlockSpec((1, Cexp, 1), lambda b, j: (b * nL + j, 0, 0))],
        out_shape=(jax.ShapeDtypeStruct((B, Cexp, L), jnp.bfloat16),
                   jax.ShapeDtypeStruct((nT, Cexp, 1), jnp.float32),
                   jax.ShapeDtypeStruct((nT, Cexp, 1), jnp.float32)),
        compiler_params=cp2,
        cost_estimate=pl.CostEstimate(
            flops=2 * M * C * Cexp, transcendentals=0,
            bytes_accessed=2 * (M * C + C * Cexp + M * Cexp)
                           + 8 * (C + nT * Cexp)),
    )(h2, scale2, shift2, w3)
    scale3, shift3 = _bn_fold(s3, ss3, params['g3'], params['b3'], n)

    # ---- stage 4: BN3 + identity residual + final ReLU ---------------------
    # (No input_output_aliasing: h3 is bf16 vs the f32 output, and aliasing
    #  the un-donated user input x would force an XLA copy.)
    out = pl.pallas_call(
        _bn_residual_relu_kernel,
        grid=(B, nL),
        in_specs=[pl.BlockSpec((1, Cexp, TL), lambda b, j: (b, 0, j)),
                  pl.BlockSpec((1, Cexp, TL), lambda b, j: (b, 0, j)),
                  pl.BlockSpec((Cexp, 1), lambda b, j: (0, 0)),
                  pl.BlockSpec((Cexp, 1), lambda b, j: (0, 0))],
        out_specs=pl.BlockSpec((1, Cexp, TL), lambda b, j: (b, 0, j)),
        out_shape=jax.ShapeDtypeStruct((B, Cexp, L), jnp.float32),
        compiler_params=cp2,
        cost_estimate=pl.CostEstimate(
            flops=3 * M * Cexp, transcendentals=0,
            bytes_accessed=2 * M * Cexp + 8 * M * Cexp + 8 * Cexp),
    )(h3, x, scale3, shift3)

    return out                                                 # (B, Cexp, L) NCL


# --------------------------------------------------------------------------
# Pure-JAX reference (matched precision: bf16 matmul operands + bf16
# inter-stage storage, f32 accumulation and BN statistics)
# --------------------------------------------------------------------------
def bottleneck_reference(x_ncl, params):
    x = x_ncl.astype(jnp.float32)

    def cmm(w, a):       # (Cout,Cin) x (B,Cin,L) -> (B,Cout,L), f32 accumulate
        return jnp.einsum('oc,bcl->bol', w.astype(jnp.bfloat16),
                          a.astype(jnp.bfloat16),
                          preferred_element_type=jnp.float32)

    def bn(h_f32, g, b):
        mean = jnp.mean(h_f32, axis=(0, 2), keepdims=True)
        var = jnp.maximum(jnp.mean(h_f32 * h_f32, axis=(0, 2), keepdims=True)
                          - mean * mean, 0.0)
        scale = g.reshape(1, -1, 1) * lax.rsqrt(var + BN_EPS)
        shift = b.reshape(1, -1, 1) - mean * scale
        # Stats from the f32 value, apply to the bf16-stored activation
        # (mirrors the kernel pipeline's inter-stage bf16 round trip).
        return h_f32.astype(jnp.bfloat16).astype(jnp.float32) * scale + shift

    h1 = cmm(params['w1'], x)
    a1 = jnp.maximum(bn(h1, params['g1'], params['b1']), 0.0)
    a1p = jnp.pad(a1, ((0, 0), (0, 0), (1, 1)))
    h2 = (cmm(params['w2'][0], a1p[:, :, :-2])
          + cmm(params['w2'][1], a1p[:, :, 1:-1])
          + cmm(params['w2'][2], a1p[:, :, 2:]))
    a2 = jnp.maximum(bn(h2, params['g2'], params['b2']), 0.0)
    h3 = cmm(params['w3'], a2)
    z = bn(h3, params['g3'], params['b3']) + x
    return jnp.maximum(z, 0.0)


def init_params(key, in_channels, out_channels):
    """Conv weights kept in torch (channel-major) layout:
      w1: (C, Cin)    == torch conv1.weight[:, :, 0]
      w2: (3, C, C)   == torch conv2.weight[:, :, k] stacked over tap k
      w3: (C*4, C)    == torch conv3.weight[:, :, 0]
    BN gamma/beta stored as (channels,)."""
    C = out_channels
    Cexp = out_channels * EXPANSION
    ks = jax.random.split(key, 9)
    return {
        'w1': jax.random.normal(ks[0], (C, in_channels), jnp.float32) * 0.1,
        'w2': jax.random.normal(ks[1], (3, C, C), jnp.float32) * 0.1,
        'w3': jax.random.normal(ks[2], (Cexp, C), jnp.float32) * 0.1,
        'g1': 1.0 + 0.1 * jax.random.normal(ks[3], (C,), jnp.float32),
        'b1': 0.1 * jax.random.normal(ks[4], (C,), jnp.float32),
        'g2': 1.0 + 0.1 * jax.random.normal(ks[5], (C,), jnp.float32),
        'b2': 0.1 * jax.random.normal(ks[6], (C,), jnp.float32),
        'g3': 1.0 + 0.1 * jax.random.normal(ks[7], (Cexp,), jnp.float32),
        'b3': 0.1 * jax.random.normal(ks[8], (Cexp,), jnp.float32),
    }


if __name__ == "__main__":
    key = jax.random.PRNGKey(0)
    k_x, k_p = jax.random.split(key)

    B, L = 2, 16
    out_channels = 4
    in_channels = out_channels * EXPANSION   # 16 -> identity residual is valid
    # NOTE: real deployments should use L tiles that are multiples of 128 so
    # the lane axis is dense; the demo stays small per test-harness convention.

    x = jax.random.normal(k_x, (B, in_channels, L), jnp.float32)   # NCL layout
    params = init_params(k_p, in_channels, out_channels)

    fwd = jax.jit(bottleneck_forward)
    out = jax.block_until_ready(fwd(x, params))
    ref = bottleneck_reference(x, params)

    assert out.shape == (B, in_channels, L), out.shape
    max_err = float(jnp.max(jnp.abs(out - ref)))
    assert max_err < 5e-2, f"max abs error {max_err}"
    print("KERNEL_OK")
</pallas_src>

<mosaic_0001>
module attributes {stable_mosaic.version = 11 : i64} {
  func.func @_conv1_stats_kernel(%arg0: i32, %arg1: i32, %arg2: memref<1x16x16xf32, #tpu.memory_space<vmem>>, %arg3: memref<4x16xbf16, #tpu.memory_space<vmem>>, %arg4: memref<1x4x16xbf16, #tpu.memory_space<vmem>>, %arg5: memref<1x4x1xf32, #tpu.memory_space<vmem>>, %arg6: memref<1x4x1xf32, #tpu.memory_space<vmem>>) attributes {dimension_semantics = [#tpu.dimension_semantics<parallel>, #tpu.dimension_semantics<parallel>], iteration_bounds = array<i64: 2, 1>, scalar_prefetch = 0 : i64, scratch_operands = 0 : i64, tpu.core_type = #tpu.core_type<tc>, window_params = [{transform_indices = @transform_0, window_bounds = array<i64: 1, 16, 16>}, {pipeline_mode = #tpu.pipeline_mode<synchronous>, transform_indices = @transform_1, window_bounds = array<i64: 4, 16>}, {transform_indices = @transform_2, window_bounds = array<i64: 1, 4, 16>}, {transform_indices = @transform_3, window_bounds = array<i64: 1, 4, 1>}, {transform_indices = @transform_4, window_bounds = array<i64: 1, 4, 1>}]} {
    %c0 = arith.constant 0 : index
    %c0_0 = arith.constant 0 : index
    %0 = vector.load %arg3[%c0, %c0_0] : memref<4x16xbf16, #tpu.memory_space<vmem>>, vector<4x16xbf16>
    %c0_1 = arith.constant 0 : index
    %c0_2 = arith.constant 0 : index
    %c0_3 = arith.constant 0 : index
    %1 = vector.load %arg2[%c0_1, %c0_2, %c0_3] : memref<1x16x16xf32, #tpu.memory_space<vmem>>, vector<1x16x16xf32>
    %2 = vector.shape_cast %1 : vector<1x16x16xf32> to vector<16x16xf32>
    %3 = arith.truncf %2 : vector<16x16xf32> to vector<16x16xbf16>
    %cst = arith.constant dense<0.000000e+00> : vector<4x16xf32>
    %4 = tpu.matmul %0, %3, %cst {dimension_numbers = #tpu.dot_dimension_numbers<[1], [0], [0], [1], [0, 0, 1, 1], [], []>} : vector<4x16xbf16>, vector<16x16xbf16>, vector<4x16xf32> -> vector<4x16xf32>
    %5 = arith.truncf %4 : vector<4x16xf32> to vector<4x16xbf16>
    %c0_4 = arith.constant 0 : index
    %c0_5 = arith.constant 0 : index
    %c0_6 = arith.constant 0 : index
    %6 = vector.load %arg4[%c0_4, %c0_5, %c0_6] : memref<1x4x16xbf16, #tpu.memory_space<vmem>>, vector<1x4x16xbf16>
    %7 = vector.shape_cast %6 : vector<1x4x16xbf16> to vector<4x16xbf16>
    %8 = vector.shape_cast %5 : vector<4x16xbf16> to vector<1x4x16xbf16>
    tpu.vector_store %arg4[%c0_4, %c0_5, %c0_6], %8 {strides = array<i32>} : memref<1x4x16xbf16, #tpu.memory_space<vmem>>, vector<1x4x16xbf16>,
    %cst_7 = arith.constant dense<0.000000e+00> : vector<4xf32>
    %9 = vector.multi_reduction <add>, %4, %cst_7 [1] : vector<4x16xf32> to vector<4xf32>
    %10 = vector.shape_cast %9 : vector<4xf32> to vector<4x1xf32>
    %c0_8 = arith.constant 0 : index
    %c0_9 = arith.constant 0 : index
    %c0_10 = arith.constant 0 : index
    %11 = vector.load %arg5[%c0_8, %c0_9, %c0_10] : memref<1x4x1xf32, #tpu.memory_space<vmem>>, vector<1x4x1xf32>
    %12 = vector.shape_cast %11 : vector<1x4x1xf32> to vector<4x1xf32>
    %13 = vector.shape_cast %10 : vector<4x1xf32> to vector<1x4x1xf32>
    tpu.vector_store %arg5[%c0_8, %c0_9, %c0_10], %13 {strides = array<i32>} : memref<1x4x1xf32, #tpu.memory_space<vmem>>, vector<1x4x1xf32>,
    %14 = arith.mulf %4, %4 : vector<4x16xf32>
    %cst_11 = arith.constant dense<0.000000e+00> : vector<4xf32>
    %15 = vector.multi_reduction <add>, %14, %cst_11 [1] : vector<4x16xf32> to vector<4xf32>
    %16 = vector.shape_cast %15 : vector<4xf32> to vector<4x1xf32>
    %c0_12 = arith.constant 0 : index
    %c0_13 = arith.constant 0 : index
    %c0_14 = arith.constant 0 : index
    %17 = vector.load %arg6[%c0_12, %c0_13, %c0_14] : memref<1x4x1xf32, #tpu.memory_space<vmem>>, vector<1x4x1xf32>
    %18 = vector.shape_cast %17 : vector<1x4x1xf32> to vector<4x1xf32>
    %19 = vector.shape_cast %16 : vector<4x1xf32> to vector<1x4x1xf32>
    tpu.vector_store %arg6[%c0_12, %c0_13, %c0_14], %19 {strides = array<i32>} : memref<1x4x1xf32, #tpu.memory_space<vmem>>, vector<1x4x1xf32>,
    return
  }
  func.func @transform_0(%arg0: i32, %arg1: i32) -> (i32, i32, i32) {
    %c0_i32 = arith.constant 0 : i32
    %c0_i32_0 = arith.constant 0 : i32
    return %arg0, %c0_i32, %arg1 : i32, i32, i32
  }
  func.func @transform_1(%arg0: i32, %arg1: i32) -> (i32, i32) {
    %c0_i32 = arith.constant 0 : i32
    %c0_i32_0 = arith.constant 0 : i32
    %c0_i32_1 = arith.constant 0 : i32
    return %c0_i32, %c0_i32_0 : i32, i32
  }
  func.func @transform_2(%arg0: i32, %arg1: i32) -> (i32, i32, i32) {
    %c0_i32 = arith.constant 0 : i32
    %c0_i32_0 = arith.constant 0 : i32
    return %arg0, %c0_i32, %arg1 : i32, i32, i32
  }
  func.func @transform_3(%arg0: i32, %arg1: i32) -> (i32, i32, i32) {
    %c1_i32 = arith.constant 1 : i32
    %0 = arith.muli %arg0, %c1_i32 : i32
    %1 = arith.addi %0, %arg1 : i32
    %c0_i32 = arith.constant 0 : i32
    %c0_i32_0 = arith.constant 0 : i32
    %c0_i32_1 = arith.constant 0 : i32
    return %1, %c0_i32, %c0_i32_0 : i32, i32, i32
  }
  func.func @transform_4(%arg0: i32, %arg1: i32) -> (i32, i32, i32) {
    %c1_i32 = arith.constant 1 : i32
    %0 = arith.muli %arg0, %c1_i32 : i32
    %1 = arith.addi %0, %arg1 : i32
    %c0_i32 = arith.constant 0 : i32
    %c0_i32_0 = arith.constant 0 : i32
    %c0_i32_1 = arith.constant 0 : i32
    return %1, %c0_i32, %c0_i32_0 : i32, i32, i32
  }
}

module attributes {stable_mosaic.version = 11 : i64} {
  func.func @_bn_relu_conv3_stats_kernel(%arg0: i32, %arg1: memref<1x4x16xbf16, #tpu.memory_space<vmem>>, %arg2: memref<4x1xf32, #tpu.memory_space<vmem>>, %arg3: memref<4x1xf32, #tpu.memory_space<vmem>>, %arg4: memref<3x4x4xbf16, #tpu.memory_space<vmem>>, %arg5: memref<1x4x16xbf16, #tpu.memory_space<vmem>>, %arg6: memref<1x4x1xf32, #tpu.memory_space<vmem>>, %arg7: memref<1x4x1xf32, #tpu.memory_space<vmem>>) attributes {dimension_semantics = [#tpu.dimension_semantics<parallel>], iteration_bounds = array<i64: 2>, scalar_prefetch = 0 : i64, scratch_operands = 0 : i64, tpu.core_type = #tpu.core_type<tc>, window_params = [{transform_indices = @transform_0, window_bounds = array<i64: 1, 4, 16>}, {pipeline_mode = #tpu.pipeline_mode<synchronous>, transform_indices = @transform_1, window_bounds = array<i64: 4, 1>}, {pipeline_mode = #tpu.pipeline_mode<synchronous>, transform_indices = @transform_2, window_bounds = array<i64: 4, 1>}, {pipeline_mode = #tpu.pipeline_mode<synchronous>, transform_indices = @transform_3, window_bounds = array<i64: 3, 4, 4>}, {transform_indices = @transform_4, window_bounds = array<i64: 1, 4, 16>}, {transform_indices = @transform_5, window_bounds = array<i64: 1, 4, 1>}, {transform_indices = @transform_6, window_bounds = array<i64: 1, 4, 1>}]} {
    %c0 = arith.constant 0 : index
    %c0_0 = arith.constant 0 : index
    %c0_1 = arith.constant 0 : index
    %0 = vector.load %arg1[%c0, %c0_0, %c0_1] : memref<1x4x16xbf16, #tpu.memory_space<vmem>>, vector<1x4x16xbf16>
    %1 = vector.shape_cast %0 : vector<1x4x16xbf16> to vector<4x16xbf16>
    %2 = arith.extf %1 : vector<4x16xbf16> to vector<4x16xf32>
    %c0_2 = arith.constant 0 : index
    %c0_3 = arith.constant 0 : index
    %3 = vector.load %arg2[%c0_2, %c0_3] : memref<4x1xf32, #tpu.memory_space<vmem>>, vector<4x1xf32>
    %4 = vector.broadcast %3 : vector<4x1xf32> to vector<4x16xf32>
    %5 = arith.mulf %2, %4 : vector<4x16xf32>
    %c0_4 = arith.constant 0 : index
    %c0_5 = arith.constant 0 : index
    %6 = vector.load %arg3[%c0_4, %c0_5] : memref<4x1xf32, #tpu.memory_space<vmem>>, vector<4x1xf32>
    %7 = vector.broadcast %6 : vector<4x1xf32> to vector<4x16xf32>
    %8 = arith.addf %5, %7 : vector<4x16xf32>
    %cst = arith.constant 0.000000e+00 : f32
    %9 = vector.broadcast %cst : f32 to vector<4x16xf32>
    %10 = arith.maximumf %8, %9 : vector<4x16xf32>
    %11 = arith.truncf %10 : vector<4x16xf32> to vector<4x16xbf16>
    %c0_6 = arith.constant 0 : index
    %c0_7 = arith.constant 0 : index
    %c0_8 = arith.constant 0 : index
    %12 = vector.load %arg4[%c0_6, %c0_7, %c0_8] : memref<3x4x4xbf16, #tpu.memory_space<vmem>>, vector<1x4x4xbf16>
    %13 = vector.shape_cast %12 : vector<1x4x4xbf16> to vector<4x4xbf16>
    %cst_9 = arith.constant dense<0.000000e+00> : vector<4x16xf32>
    %14 = tpu.matmul %13, %11, %cst_9 {dimension_numbers = #tpu.dot_dimension_numbers<[1], [0], [0], [1], [0, 0, 1, 1], [], []>} : vector<4x4xbf16>, vector<4x16xbf16>, vector<4x16xf32> -> vector<4x16xf32>
    %c1 = arith.constant 1 : index
    %c0_10 = arith.constant 0 : index
    %c0_11 = arith.constant 0 : index
    %15 = vector.load %arg4[%c1, %c0_10, %c0_11] : memref<3x4x4xbf16, #tpu.memory_space<vmem>>, vector<1x4x4xbf16>
    %16 = vector.shape_cast %15 : vector<1x4x4xbf16> to vector<4x4xbf16>
    %cst_12 = arith.constant dense<0.000000e+00> : vector<4x16xf32>
    %17 = tpu.matmul %16, %11, %cst_12 {dimension_numbers = #tpu.dot_dimension_numbers<[1], [0], [0], [1], [0, 0, 1, 1], [], []>} : vector<4x4xbf16>, vector<4x16xbf16>, vector<4x16xf32> -> vector<4x16xf32>
    %c2 = arith.constant 2 : index
    %c0_13 = arith.constant 0 : index
    %c0_14 = arith.constant 0 : index
    %18 = vector.load %arg4[%c2, %c0_13, %c0_14] : memref<3x4x4xbf16, #tpu.memory_space<vmem>>, vector<1x4x4xbf16>
    %19 = vector.shape_cast %18 : vector<1x4x4xbf16> to vector<4x4xbf16>
    %cst_15 = arith.constant dense<0.000000e+00> : vector<4x16xf32>
    %20 = tpu.matmul %19, %11, %cst_15 {dimension_numbers = #tpu.dot_dimension_numbers<[1], [0], [0], [1], [0, 0, 1, 1], [], []>} : vector<4x4xbf16>, vector<4x16xbf16>, vector<4x16xf32> -> vector<4x16xf32>
    %cst_16 = arith.constant 0.000000e+00 : f32
    %21 = vector.broadcast %cst_16 : f32 to vector<4x1xf32>
    %22 = vector.extract_strided_slice %14 {offsets = [0, 0], sizes = [4, 15], strides = [1, 1]} : vector<4x16xf32> to vector<4x15xf32>
    %23 = tpu.concatenate %21, %22 in 1 : vector<4x1xf32>, vector<4x15xf32> -> vector<4x16xf32>
    %24 = vector.extract_strided_slice %20 {offsets = [0, 1], sizes = [4, 15], strides = [1, 1]} : vector<4x16xf32> to vector<4x15xf32>
    %25 = tpu.concatenate %24, %21 in 1 : vector<4x15xf32>, vector<4x1xf32> -> vector<4x16xf32>
    %26 = arith.addf %17, %23 : vector<4x16xf32>
    %27 = arith.addf %26, %25 : vector<4x16xf32>
    %28 = arith.truncf %27 : vector<4x16xf32> to vector<4x16xbf16>
    %c0_17 = arith.constant 0 : index
    %c0_18 = arith.constant 0 : index
    %c0_19 = arith.constant 0 : index
    %29 = vector.load %arg5[%c0_17, %c0_18, %c0_19] : memref<1x4x16xbf16, #tpu.memory_space<vmem>>, vector<1x4x16xbf16>
    %30 = vector.shape_cast %29 : vector<1x4x16xbf16> to vector<4x16xbf16>
    %31 = vector.shape_cast %28 : vector<4x16xbf16> to vector<1x4x16xbf16>
    tpu.vector_store %arg5[%c0_17, %c0_18, %c0_19], %31 {strides = array<i32>} : memref<1x4x16xbf16, #tpu.memory_space<vmem>>, vector<1x4x16xbf16>,
    %cst_20 = arith.constant dense<0.000000e+00> : vector<4xf32>
    %32 = vector.multi_reduction <add>, %27, %cst_20 [1] : vector<4x16xf32> to vector<4xf32>
    %33 = vector.shape_cast %32 : vector<4xf32> to vector<4x1xf32>
    %c0_21 = arith.constant 0 : index
    %c0_22 = arith.constant 0 : index
    %c0_23 = arith.constant 0 : index
    %34 = vector.load %arg6[%c0_21, %c0_22, %c0_23] : memref<1x4x1xf32, #tpu.memory_space<vmem>>, vector<1x4x1xf32>
    %35 = vector.shape_cast %34 : vector<1x4x1xf32> to vector<4x1xf32>
    %36 = vector.shape_cast %33 : vector<4x1xf32> to vector<1x4x1xf32>
    tpu.vector_store %arg6[%c0_21, %c0_22, %c0_23], %36 {strides = array<i32>} : memref<1x4x1xf32, #tpu.memory_space<vmem>>, vector<1x4x1xf32>,
    %37 = arith.mulf %27, %27 : vector<4x16xf32>
    %cst_24 = arith.constant dense<0.000000e+00> : vector<4xf32>
    %38 = vector.multi_reduction <add>, %37, %cst_24 [1] : vector<4x16xf32> to vector<4xf32>
    %39 = vector.shape_cast %38 : vector<4xf32> to vector<4x1xf32>
    %c0_25 = arith.constant 0 : index
    %c0_26 = arith.constant 0 : index
    %c0_27 = arith.constant 0 : index
    %40 = vector.load %arg7[%c0_25, %c0_26, %c0_27] : memref<1x4x1xf32, #tpu.memory_space<vmem>>, vector<1x4x1xf32>
    %41 = vector.shape_cast %40 : vector<1x4x1xf32> to vector<4x1xf32>
    %42 = vector.shape_cast %39 : vector<4x1xf32> to vector<1x4x1xf32>
    tpu.vector_store %arg7[%c0_25, %c0_26, %c0_27], %42 {strides = array<i32>} : memref<1x4x1xf32, #tpu.memory_space<vmem>>, vector<1x4x1xf32>,
    return
  }
  func.func @transform_0(%arg0: i32) -> (i32, i32, i32) {
    %c0_i32 = arith.constant 0 : i32
    %c0_i32_0 = arith.constant 0 : i32
    %c0_i32_1 = arith.constant 0 : i32
    return %arg0, %c0_i32, %c0_i32_0 : i32, i32, i32
  }
  func.func @transform_1(%arg0: i32) -> (i32, i32) {
    %c0_i32 = arith.constant 0 : i32
    %c0_i32_0 = arith.constant 0 : i32
    %c0_i32_1 = arith.constant 0 : i32
    return %c0_i32, %c0_i32_0 : i32, i32
  }
  func.func @transform_2(%arg0: i32) -> (i32, i32) {
    %c0_i32 = arith.constant 0 : i32
    %c0_i32_0 = arith.constant 0 : i32
    %c0_i32_1 = arith.constant 0 : i32
    return %c0_i32, %c0_i32_0 : i32, i32
  }
  func.func @transform_3(%arg0: i32) -> (i32, i32, i32) {
    %c0_i32 = arith.constant 0 : i32
    %c0_i32_0 = arith.constant 0 : i32
    %c0_i32_1 = arith.constant 0 : i32
    %c0_i32_2 = arith.constant 0 : i32
    return %c0_i32, %c0_i32_0, %c0_i32_1 : i32, i32, i32
  }
  func.func @transform_4(%arg0: i32) -> (i32, i32, i32) {
    %c0_i32 = arith.constant 0 : i32
    %c0_i32_0 = arith.constant 0 : i32
    %c0_i32_1 = arith.constant 0 : i32
    return %arg0, %c0_i32, %c0_i32_0 : i32, i32, i32
  }
  func.func @transform_5(%arg0: i32) -> (i32, i32, i32) {
    %c0_i32 = arith.constant 0 : i32
    %c0_i32_0 = arith.constant 0 : i32
    %c0_i32_1 = arith.constant 0 : i32
    return %arg0, %c0_i32, %c0_i32_0 : i32, i32, i32
  }
  func.func @transform_6(%arg0: i32) -> (i32, i32, i32) {
    %c0_i32 = arith.constant 0 : i32
    %c0_i32_0 = arith.constant 0 : i32
    %c0_i32_1 = arith.constant 0 : i32
    return %arg0, %c0_i32, %c0_i32_0 : i32, i32, i32
  }
}

module attributes {stable_mosaic.version = 11 : i64} {
  func.func @_bn_relu_conv_stats_kernel(%arg0: i32, %arg1: i32, %arg2: memref<1x4x16xbf16, #tpu.memory_space<vmem>>, %arg3: memref<4x1xf32, #tpu.memory_space<vmem>>, %arg4: memref<4x1xf32, #tpu.memory_space<vmem>>, %arg5: memref<16x4xbf16, #tpu.memory_space<vmem>>, %arg6: memref<1x16x16xbf16, #tpu.memory_space<vmem>>, %arg7: memref<1x16x1xf32, #tpu.memory_space<vmem>>, %arg8: memref<1x16x1xf32, #tpu.memory_space<vmem>>) attributes {dimension_semantics = [#tpu.dimension_semantics<parallel>, #tpu.dimension_semantics<parallel>], iteration_bounds = array<i64: 2, 1>, scalar_prefetch = 0 : i64, scratch_operands = 0 : i64, tpu.core_type = #tpu.core_type<tc>, window_params = [{transform_indices = @transform_0, window_bounds = array<i64: 1, 4, 16>}, {pipeline_mode = #tpu.pipeline_mode<synchronous>, transform_indices = @transform_1, window_bounds = array<i64: 4, 1>}, {pipeline_mode = #tpu.pipeline_mode<synchronous>, transform_indices = @transform_2, window_bounds = array<i64: 4, 1>}, {pipeline_mode = #tpu.pipeline_mode<synchronous>, transform_indices = @transform_3, window_bounds = array<i64: 16, 4>}, {transform_indices = @transform_4, window_bounds = array<i64: 1, 16, 16>}, {transform_indices = @transform_5, window_bounds = array<i64: 1, 16, 1>}, {transform_indices = @transform_6, window_bounds = array<i64: 1, 16, 1>}]} {
    %c0 = arith.constant 0 : index
    %c0_0 = arith.constant 0 : index
    %c0_1 = arith.constant 0 : index
    %0 = vector.load %arg2[%c0, %c0_0, %c0_1] : memref<1x4x16xbf16, #tpu.memory_space<vmem>>, vector<1x4x16xbf16>
    %1 = vector.shape_cast %0 : vector<1x4x16xbf16> to vector<4x16xbf16>
    %2 = arith.extf %1 : vector<4x16xbf16> to vector<4x16xf32>
    %c0_2 = arith.constant 0 : index
    %c0_3 = arith.constant 0 : index
    %3 = vector.load %arg3[%c0_2, %c0_3] : memref<4x1xf32, #tpu.memory_space<vmem>>, vector<4x1xf32>
    %4 = vector.broadcast %3 : vector<4x1xf32> to vector<4x16xf32>
    %5 = arith.mulf %2, %4 : vector<4x16xf32>
    %c0_4 = arith.constant 0 : index
    %c0_5 = arith.constant 0 : index
    %6 = vector.load %arg4[%c0_4, %c0_5] : memref<4x1xf32, #tpu.memory_space<vmem>>, vector<4x1xf32>
    %7 = vector.broadcast %6 : vector<4x1xf32> to vector<4x16xf32>
    %8 = arith.addf %5, %7 : vector<4x16xf32>
    %cst = arith.constant 0.000000e+00 : f32
    %9 = vector.broadcast %cst : f32 to vector<4x16xf32>
    %10 = arith.maximumf %8, %9 : vector<4x16xf32>
    %c0_6 = arith.constant 0 : index
    %c0_7 = arith.constant 0 : index
    %11 = vector.load %arg5[%c0_6, %c0_7] : memref<16x4xbf16, #tpu.memory_space<vmem>>, vector<16x4xbf16>
    %12 = arith.truncf %10 : vector<4x16xf32> to vector<4x16xbf16>
    %cst_8 = arith.constant dense<0.000000e+00> : vector<16x16xf32>
    %13 = tpu.matmul %11, %12, %cst_8 {dimension_numbers = #tpu.dot_dimension_numbers<[1], [0], [0], [1], [0, 0, 1, 1], [], []>} : vector<16x4xbf16>, vector<4x16xbf16>, vector<16x16xf32> -> vector<16x16xf32>
    %14 = arith.truncf %13 : vector<16x16xf32> to vector<16x16xbf16>
    %c0_9 = arith.constant 0 : index
    %c0_10 = arith.constant 0 : index
    %c0_11 = arith.constant 0 : index
    %15 = vector.load %arg6[%c0_9, %c0_10, %c0_11] : memref<1x16x16xbf16, #tpu.memory_space<vmem>>, vector<1x16x16xbf16>
    %16 = vector.shape_cast %15 : vector<1x16x16xbf16> to vector<16x16xbf16>
    %17 = vector.shape_cast %14 : vector<16x16xbf16> to vector<1x16x16xbf16>
    tpu.vector_store %arg6[%c0_9, %c0_10, %c0_11], %17 {strides = array<i32>} : memref<1x16x16xbf16, #tpu.memory_space<vmem>>, vector<1x16x16xbf16>,
    %cst_12 = arith.constant dense<0.000000e+00> : vector<16xf32>
    %18 = vector.multi_reduction <add>, %13, %cst_12 [1] : vector<16x16xf32> to vector<16xf32>
    %19 = vector.shape_cast %18 : vector<16xf32> to vector<16x1xf32>
    %c0_13 = arith.constant 0 : index
    %c0_14 = arith.constant 0 : index
    %c0_15 = arith.constant 0 : index
    %20 = vector.load %arg7[%c0_13, %c0_14, %c0_15] : memref<1x16x1xf32, #tpu.memory_space<vmem>>, vector<1x16x1xf32>
    %21 = vector.shape_cast %20 : vector<1x16x1xf32> to vector<16x1xf32>
    %22 = vector.shape_cast %19 : vector<16x1xf32> to vector<1x16x1xf32>
    tpu.vector_store %arg7[%c0_13, %c0_14, %c0_15], %22 {strides = array<i32>} : memref<1x16x1xf32, #tpu.memory_space<vmem>>, vector<1x16x1xf32>,
    %23 = arith.mulf %13, %13 : vector<16x16xf32>
    %cst_16 = arith.constant dense<0.000000e+00> : vector<16xf32>
    %24 = vector.multi_reduction <add>, %23, %cst_16 [1] : vector<16x16xf32> to vector<16xf32>
    %25 = vector.shape_cast %24 : vector<16xf32> to vector<16x1xf32>
    %c0_17 = arith.constant 0 : index
    %c0_18 = arith.constant 0 : index
    %c0_19 = arith.constant 0 : index
    %26 = vector.load %arg8[%c0_17, %c0_18, %c0_19] : memref<1x16x1xf32, #tpu.memory_space<vmem>>, vector<1x16x1xf32>
    %27 = vector.shape_cast %26 : vector<1x16x1xf32> to vector<16x1xf32>
    %28 = vector.shape_cast %25 : vector<16x1xf32> to vector<1x16x1xf32>
    tpu.vector_store %arg8[%c0_17, %c0_18, %c0_19], %28 {strides = array<i32>} : memref<1x16x1xf32, #tpu.memory_space<vmem>>, vector<1x16x1xf32>,
    return
  }
  func.func @transform_0(%arg0: i32, %arg1: i32) -> (i32, i32, i32) {
    %c0_i32 = arith.constant 0 : i32
    %c0_i32_0 = arith.constant 0 : i32
    return %arg0, %c0_i32, %arg1 : i32, i32, i32
  }
  func.func @transform_1(%arg0: i32, %arg1: i32) -> (i32, i32) {
    %c0_i32 = arith.constant 0 : i32
    %c0_i32_0 = arith.constant 0 : i32
    %c0_i32_1 = arith.constant 0 : i32
    return %c0_i32, %c0_i32_0 : i32, i32
  }
  func.func @transform_2(%arg0: i32, %arg1: i32) -> (i32, i32) {
    %c0_i32 = arith.constant 0 : i32
    %c0_i32_0 = arith.constant 0 : i32
    %c0_i32_1 = arith.constant 0 : i32
    return %c0_i32, %c0_i32_0 : i32, i32
  }
  func.func @transform_3(%arg0: i32, %arg1: i32) -> (i32, i32) {
    %c0_i32 = arith.constant 0 : i32
    %c0_i32_0 = arith.constant 0 : i32
    %c0_i32_1 = arith.constant 0 : i32
    return %c0_i32, %c0_i32_0 : i32, i32
  }
  func.func @transform_4(%arg0: i32, %arg1: i32) -> (i32, i32, i32) {
    %c0_i32 = arith.constant 0 : i32
    %c0_i32_0 = arith.constant 0 : i32
    return %arg0, %c0_i32, %arg1 : i32, i32, i32
  }
  func.func @transform_5(%arg0: i32, %arg1: i32) -> (i32, i32, i32) {
    %c1_i32 = arith.constant 1 : i32
    %0 = arith.muli %arg0, %c1_i32 : i32
    %1 = arith.addi %0, %arg1 : i32
    %c0_i32 = arith.constant 0 : i32
    %c0_i32_0 = arith.constant 0 : i32
    %c0_i32_1 = arith.constant 0 : i32
    return %1, %c0_i32, %c0_i32_0 : i32, i32, i32
  }
  func.func @transform_6(%arg0: i32, %arg1: i32) -> (i32, i32, i32) {
    %c1_i32 = arith.constant 1 : i32
    %0 = arith.muli %arg0, %c1_i32 : i32
    %1 = arith.addi %0, %arg1 : i32
    %c0_i32 = arith.constant 0 : i32
    %c0_i32_0 = arith.constant 0 : i32
    %c0_i32_1 = arith.constant 0 : i32
    return %1, %c0_i32, %c0_i32_0 : i32, i32, i32
  }
}

module attributes {stable_mosaic.version = 11 : i64} {
  func.func @_bn_residual_relu_kernel(%arg0: i32, %arg1: i32, %arg2: memref<1x16x16xbf16, #tpu.memory_space<vmem>>, %arg3: memref<1x16x16xf32, #tpu.memory_space<vmem>>, %arg4: memref<16x1xf32, #tpu.memory_space<vmem>>, %arg5: memref<16x1xf32, #tpu.memory_space<vmem>>, %arg6: memref<1x16x16xf32, #tpu.memory_space<vmem>>) attributes {dimension_semantics = [#tpu.dimension_semantics<parallel>, #tpu.dimension_semantics<parallel>], iteration_bounds = array<i64: 2, 1>, scalar_prefetch = 0 : i64, scratch_operands = 0 : i64, tpu.core_type = #tpu.core_type<tc>, window_params = [{transform_indices = @transform_0, window_bounds = array<i64: 1, 16, 16>}, {transform_indices = @transform_1, window_bounds = array<i64: 1, 16, 16>}, {pipeline_mode = #tpu.pipeline_mode<synchronous>, transform_indices = @transform_2, window_bounds = array<i64: 16, 1>}, {pipeline_mode = #tpu.pipeline_mode<synchronous>, transform_indices = @transform_3, window_bounds = array<i64: 16, 1>}, {transform_indices = @transform_4, window_bounds = array<i64: 1, 16, 16>}]} {
    %c0 = arith.constant 0 : index
    %c0_0 = arith.constant 0 : index
    %c0_1 = arith.constant 0 : index
    %0 = vector.load %arg2[%c0, %c0_0, %c0_1] : memref<1x16x16xbf16, #tpu.memory_space<vmem>>, vector<1x16x16xbf16>
    %1 = vector.shape_cast %0 : vector<1x16x16xbf16> to vector<16x16xbf16>
    %2 = arith.extf %1 : vector<16x16xbf16> to vector<16x16xf32>
    %c0_2 = arith.constant 0 : index
    %c0_3 = arith.constant 0 : index
    %3 = vector.load %arg4[%c0_2, %c0_3] : memref<16x1xf32, #tpu.memory_space<vmem>>, vector<16x1xf32>
    %4 = vector.broadcast %3 : vector<16x1xf32> to vector<16x16xf32>
    %5 = arith.mulf %2, %4 : vector<16x16xf32>
    %c0_4 = arith.constant 0 : index
    %c0_5 = arith.constant 0 : index
    %6 = vector.load %arg5[%c0_4, %c0_5] : memref<16x1xf32, #tpu.memory_space<vmem>>, vector<16x1xf32>
    %7 = vector.broadcast %6 : vector<16x1xf32> to vector<16x16xf32>
    %8 = arith.addf %5, %7 : vector<16x16xf32>
    %c0_6 = arith.constant 0 : index
    %c0_7 = arith.constant 0 : index
    %c0_8 = arith.constant 0 : index
    %9 = vector.load %arg3[%c0_6, %c0_7, %c0_8] : memref<1x16x16xf32, #tpu.memory_space<vmem>>, vector<1x16x16xf32>
    %10 = vector.shape_cast %9 : vector<1x16x16xf32> to vector<16x16xf32>
    %11 = arith.addf %8, %10 : vector<16x16xf32>
    %cst = arith.constant 0.000000e+00 : f32
    %12 = vector.broadcast %cst : f32 to vector<16x16xf32>
    %13 = arith.maximumf %11, %12 : vector<16x16xf32>
    %c0_9 = arith.constant 0 : index
    %c0_10 = arith.constant 0 : index
    %c0_11 = arith.constant 0 : index
    %14 = vector.load %arg6[%c0_9, %c0_10, %c0_11] : memref<1x16x16xf32, #tpu.memory_space<vmem>>, vector<1x16x16xf32>
    %15 = vector.shape_cast %14 : vector<1x16x16xf32> to vector<16x16xf32>
    %16 = vector.shape_cast %13 : vector<16x16xf32> to vector<1x16x16xf32>
    tpu.vector_store %arg6[%c0_9, %c0_10, %c0_11], %16 {strides = array<i32>} : memref<1x16x16xf32, #tpu.memory_space<vmem>>, vector<1x16x16xf32>,
    return
  }
  func.func @transform_0(%arg0: i32, %arg1: i32) -> (i32, i32, i32) {
    %c0_i32 = arith.constant 0 : i32
    %c0_i32_0 = arith.constant 0 : i32
    return %arg0, %c0_i32, %arg1 : i32, i32, i32
  }
  func.func @transform_1(%arg0: i32, %arg1: i32) -> (i32, i32, i32) {
    %c0_i32 = arith.constant 0 : i32
    %c0_i32_0 = arith.constant 0 : i32
    return %arg0, %c0_i32, %arg1 : i32, i32, i32
  }
  func.func @transform_2(%arg0: i32, %arg1: i32) -> (i32, i32) {
    %c0_i32 = arith.constant 0 : i32
    %c0_i32_0 = arith.constant 0 : i32
    %c0_i32_1 = arith.constant 0 : i32
    return %c0_i32, %c0_i32_0 : i32, i32
  }
  func.func @transform_3(%arg0: i32, %arg1: i32) -> (i32, i32) {
    %c0_i32 = arith.constant 0 : i32
    %c0_i32_0 = arith.constant 0 : i32
    %c0_i32_1 = arith.constant 0 : i32
    return %c0_i32, %c0_i32_0 : i32, i32
  }
  func.func @transform_4(%arg0: i32, %arg1: i32) -> (i32, i32, i32) {
    %c0_i32 = arith.constant 0 : i32
    %c0_i32_0 = arith.constant 0 : i32
    return %arg0, %c0_i32, %arg1 : i32, i32, i32
  }
}

</mosaic_0001>

<llo_original>
// kernel: bottleneck_forward.4
$region0: #{bottleneck_forward.4}
  #allocation0 [shape = 'u32[]', space=smem, size = 0x4, offset = 0x4, fixed_abs, tag = 'smem constant byte address 0x4 - core index']
  #allocation1 [shape = 'u32[72,128]{1,0:T(1,128)}', space=vmem, size = 0x9000, scoped, tag = 'internal scratch']
  %s0 = inlined_call_operand.hbm [shape: f32[2,16,16], index: 0, kind: input, shape index: {}]
  %s1 = inlined_call_operand.vmem [shape: bf16[4,16], index: 1, kind: input, shape index: {}]
  %s2 = inlined_call_operand.vmem [shape: bf16[2,4,16], index: 2, kind: output, shape index: {0}]
  %s3 = inlined_call_operand.vmem [shape: f32[2,4,1], index: 3, kind: output, shape index: {1}]
  %s4 = inlined_call_operand.vmem [shape: f32[2,4,1], index: 4, kind: output, shape index: {2}]
  %5 = xla_tuple %s2, %s3, %s4
  %s6 = sld [smem:[#allocation0]]
  $region61: #{bottleneck_forward.4} parent=0
    _
  %s8 = ssub.s32 1, %s6
  %s9 = scalar_select 0, %s8, %s6
  $region1: #{bottleneck_forward.4} parent=0
    #allocation2 [shape = 'u8[16384]{0}', space=vmem, size = 0x4000, scoped, tag = 'input window, operand 0']
    #allocation3 [shape = 's32[2]{0}', space=sflag, size = 0x8, scoped, tag = 'scoped memory for bottleneck_forward.4']
    %10 = vsyncpa [#allocation3], 0
    %s11 = scalar_lea.sflag [#allocation3], 1
    %12 = vsyncpa %s11, 0
    loop: start=0, step=1, limit=4
    $region2: #{bottleneck_forward.4} parent=1 // loop_pre_header
      _
    $region3: #{bottleneck_forward.4} parent=1 // loop_header
      %s14 = sphi 0, %s18
      %p15 = scmp.ge.s32.totalorder %s14, 4
      %s21 = sphi 0, %s33
      %s22 = sphi 0, %s29
      %s23 = sphi 0, %s21
      %s24 = sphi 0, %s22
      %s25 = sphi 0, %s23
      %s26 = sphi 0, %s24
      %s38 = sphi 0, %s40
      %s41 = sphi 0, %s38
      %s42 = sphi 0, %s41
      %s58 = sphi 0, %s42
      %s62 = sphi 0, %s62
      %s64 = sphi 0, %s62
      %s65 = sphi 0, %s64
      %s79 = sphi 0, %s65
      %s87 = sphi 0, %s89
      %s90 = sphi 0, %s87
      %s91 = sphi 0, %s90
      %s107 = sphi 0, %s91
      %s115 = sphi 0, %s117
      %s118 = sphi 0, %s115
      %s119 = sphi 0, %s118
      %s135 = sphi 0, %s119
      %s143 = sphi 0, %s145
      %s146 = sphi 0, %s143
      %s147 = sphi 0, %s146
      %s163 = sphi 0, %s147
    $region4: #{bottleneck_forward.4} parent=1 // loop_header_branch
      %17 = sbr.rel (%p15) target = $region8
    $region5: #{bottleneck_forward.4} parent=1 // loop_body
      %s19 = ssub.s32 %s14, 1
      %s20 = ssub.s32 %s14, 2
      %s27 = sadd.s32 1, %s22
      %p28 = scmp.ge.s32.totalorder %s27, 1
      %s29 = scalar_select %p28, 0, %s27
      %s30 = sadd.s32 1, %s21
      %s31 = scalar_select %p28, %s30, %s21
      %p32 = scmp.ge.s32.totalorder %s31, 2
      %s33 = scalar_select %p32, 0, %s31
      %s34 = ssub.s32 %s21, %s33
      %s35 = ssub.s32 %s22, %s29
      %s36 = sor.u32 %s34, %s35
      %p37 = scmp.eq.s32.totalorder %s36, 0
      %s39 = sadd.s32 %s38, 1
      %s40 = scalar_select %p37, %s38, %s39
      %p43 = pneg %p37
      %p44 = scmp.eq.s32.totalorder %s14, 1
      %p45 = por %p43, %p44
      %p46 = scmp.ne.s32.totalorder %s38, %s41
      %p47 = scmp.eq.s32.totalorder %s14, 0
      %p48 = por %p46, %p47
      %p49 = scmp.ne.s32.totalorder %s38, %s41
      %p50 = scmp.eq.s32.totalorder %s19, 1
      %p51 = por %p49, %p50
      %p52 = scmp.ne.s32.totalorder %s41, %s42
      %p53 = scmp.eq.s32.totalorder %s19, 0
      %p54 = por %p52, %p53
      %p55 = scmp.ne.s32.totalorder %s41, %s42
      %p56 = scmp.eq.s32.totalorder %s20, 1
      %p57 = por %p55, %p56
      %p59 = scmp.ne.s32.totalorder %s42, %s58
      %p60 = scmp.eq.s32.totalorder %s20, 0
      %p61 = por %p59, %p60
      %s63 = sadd.s32 %s62, 1
      %p66 = scmp.eq.s32.totalorder %s14, 1
      %p67 = scmp.ne.s32.totalorder %s62, %s64
      %p68 = scmp.eq.s32.totalorder %s14, 0
      %p69 = por %p67, %p68
      %p70 = scmp.ne.s32.totalorder %s62, %s64
      %p71 = scmp.eq.s32.totalorder %s19, 1
      %p72 = por %p70, %p71
      %p73 = scmp.ne.s32.totalorder %s64, %s65
      %p74 = scmp.eq.s32.totalorder %s19, 0
      %p75 = por %p73, %p74
      %p76 = scmp.ne.s32.totalorder %s64, %s65
      %p77 = scmp.eq.s32.totalorder %s20, 1
      %p78 = por %p76, %p77
      %p80 = scmp.ne.s32.totalorder %s65, %s79
      %p81 = scmp.eq.s32.totalorder %s20, 0
      %p82 = por %p80, %p81
      %s83 = ssub.s32 %s21, %s33
      %s84 = ssub.s32 %s22, %s29
      %s85 = sor.u32 %s83, %s84
      %p86 = scmp.eq.s32.totalorder %s85, 0
      %s88 = sadd.s32 %s87, 1
      %s89 = scalar_select %p86, %s87, %s88
      %p92 = pneg %p86
      %p93 = scmp.eq.s32.totalorder %s14, 1
      %p94 = por %p92, %p93
      %p95 = scmp.ne.s32.totalorder %s87, %s90
      %p96 = scmp.eq.s32.totalorder %s14, 0
      %p97 = por %p95, %p96
      %p98 = scmp.ne.s32.totalorder %s87, %s90
      %p99 = scmp.eq.s32.totalorder %s19, 1
      %p100 = por %p98, %p99
      %p101 = scmp.ne.s32.totalorder %s90, %s91
      %p102 = scmp.eq.s32.totalorder %s19, 0
      %p103 = por %p101, %p102
      %p104 = scmp.ne.s32.totalorder %s90, %s91
      %p105 = scmp.eq.s32.totalorder %s20, 1
      %p106 = por %p104, %p105
      %p108 = scmp.ne.s32.totalorder %s91, %s107
      %p109 = scmp.eq.s32.totalorder %s20, 0
      %p110 = por %p108, %p109
      %s111 = sadd.s32 %s21, %s22
      %s112 = sadd.s32 %s33, %s29
      %s113 = ssub.s32 %s111, %s112
      %p114 = scmp.eq.s32.totalorder %s113, 0
      %s116 = sadd.s32 %s115, 1
      %s117 = scalar_select %p114, %s115, %s116
      %p120 = pneg %p114
      %p121 = scmp.eq.s32.totalorder %s14, 1
      %p122 = por %p120, %p121
      %p123 = scmp.ne.s32.totalorder %s115, %s118
      %p124 = scmp.eq.s32.totalorder %s14, 0
      %p125 = por %p123, %p124
      %p126 = scmp.ne.s32.totalorder %s115, %s118
      %p127 = scmp.eq.s32.totalorder %s19, 1
      %p128 = por %p126, %p127
      %p129 = scmp.ne.s32.totalorder %s118, %s119
      %p130 = scmp.eq.s32.totalorder %s19, 0
      %p131 = por %p129, %p130
      %p132 = scmp.ne.s32.totalorder %s118, %s119
      %p133 = scmp.eq.s32.totalorder %s20, 1
      %p134 = por %p132, %p133
      %p136 = scmp.ne.s32.totalorder %s119, %s135
      %p137 = scmp.eq.s32.totalorder %s20, 0
      %p138 = por %p136, %p137
      %s139 = sadd.s32 %s21, %s22
      %s140 = sadd.s32 %s33, %s29
      %s141 = ssub.s32 %s139, %s140
      %p142 = scmp.eq.s32.totalorder %s141, 0
      %s144 = sadd.s32 %s143, 1
      %s145 = scalar_select %p142, %s143, %s144
      %p148 = pneg %p142
      %p149 = scmp.eq.s32.totalorder %s14, 1
      %p150 = por %p148, %p149
      %p151 = scmp.ne.s32.totalorder %s143, %s146
      %p152 = scmp.eq.s32.totalorder %s14, 0
      %p153 = por %p151, %p152
      %p154 = scmp.ne.s32.totalorder %s143, %s146
      %p155 = scmp.eq.s32.totalorder %s19, 1
      %p156 = por %p154, %p155
      %p157 = scmp.ne.s32.totalorder %s146, %s147
      %p158 = scmp.eq.s32.totalorder %s19, 0
      %p159 = por %p157, %p158
      %p160 = scmp.ne.s32.totalorder %s146, %s147
      %p161 = scmp.eq.s32.totalorder %s20, 1
      %p162 = por %p160, %p161
      %p164 = scmp.ne.s32.totalorder %s147, %s163
      %p165 = scmp.eq.s32.totalorder %s20, 0
      %p166 = por %p164, %p165
      %p167 = scmp.le.s32.totalorder 1, %s14
      %p168 = scmp.lt.s32.totalorder %s14, 3
      %p169 = pnand %p167, %p168
      %p170 = pneg %p169
      // Predicated region
      $region9: #{bottleneck_forward.4} parent=5 // pred_check
        _
      $region10: #{bottleneck_forward.4} parent=5 // pred_check_branch
        %172 = sbr.rel (%p169) target = $region12
      $region11: #{bottleneck_forward.4} parent=5 // pred_region
        %s173 = ssub.s32 %s14, 1
        // Predicated region
        $region13: #{bottleneck_forward.4} parent=11 // pred_check
          %p174 = pneg %p75
        $region14: #{bottleneck_forward.4} parent=11 // pred_check_branch
          %176 = sbr.rel (%p174) target = $region16
        $region15: #{bottleneck_forward.4} parent=11 // pred_region
          _
        $region16: #{bottleneck_forward.4} parent=11 // pred_fallthru
          _
      $region12: #{bottleneck_forward.4} parent=5 // pred_fallthru
        _
      %p177 = scmp.lt.s32.totalorder %s14, 2
      // Predicated region
      $region17: #{bottleneck_forward.4} parent=5 // pred_check
        %p178 = pneg %p177
      $region18: #{bottleneck_forward.4} parent=5 // pred_check_branch
        %180 = sbr.rel (%p178) target = $region20
      $region19: #{bottleneck_forward.4} parent=5 // pred_region
        // Predicated region
        $region21: #{bottleneck_forward.4} parent=19 // pred_check
          %p181 = pneg %p48
        $region22: #{bottleneck_forward.4} parent=19 // pred_check_branch
          %183 = sbr.rel (%p181) target = $region24
        $region23: #{bottleneck_forward.4} parent=19 // pred_region
          %s184 = sand.u32 %s38, 1
          %s185 = scalar_lea.sflag [#allocation3], %s184
          %s186 = sand.u32 %s38, 1
          %s187 = smul.addr %s186, 16
          %s188 = scalar_lea.vmem [#allocation2], %s187
          %190 = vsyncadd %s185, 0
          %s191 = smul.addr %s21, 2
          %s192 = sadd.s32 %s22, %s191
          %s193 = smul.addr %s192, 8
          %s194 = scalar_lea.hbm %s0, %s193
          %s195 = sshll.u32 %s194, 4
          %s196 = int_to_ptr.hbm [resolvable:$true] %s195
          %s197 = sshll.u32 %s188, 4
          %s198 = int_to_ptr.vmem [resolvable:$true] %s197
          %203 = dma.hbm_to_vmem [thread:$0]  %s196, 256, %s198, %s185, 128, 128, 8
        $region24: #{bottleneck_forward.4} parent=19 // pred_fallthru
          _
      $region20: #{bottleneck_forward.4} parent=5 // pred_fallthru
        _
      %p204 = scmp.le.s32.totalorder 1, %s14
      %p205 = scmp.lt.s32.totalorder %s14, 3
      %p206 = pnand %p204, %p205
      %p207 = pneg %p206
      // Predicated region
      $region25: #{bottleneck_forward.4} parent=5 // pred_check
        _
      $region26: #{bottleneck_forward.4} parent=5 // pred_check_branch
        %209 = sbr.rel (%p206) target = $region28
      $region27: #{bottleneck_forward.4} parent=5 // pred_region
        %s210 = ssub.s32 %s14, 1
        %s211 = sand.u32 %s41, 1
        %s212 = scalar_lea.sflag [#allocation3], %s211
        %s213 = sand.u32 %s41, 1
        %s214 = smul.addr %s213, 16
        %s215 = scalar_lea.vmem [#allocation2], %s214
        // Predicated region
        $region29: #{bottleneck_forward.4} parent=27 // pred_check
          %p216 = pneg %p54
        $region30: #{bottleneck_forward.4} parent=27 // pred_check_branch
          %218 = sbr.rel (%p216) target = $region32
        $region31: #{bottleneck_forward.4} parent=27 // pred_region
          %220 = dma.done %s212, 256
        $region32: #{bottleneck_forward.4} parent=27 // pred_fallthru
          _
        %s221 = sand.u32 %s41, 1
        %s222 = scalar_lea.sflag [#allocation3], %s221
        %s223 = sand.u32 %s41, 1
        %s224 = smul.addr %s223, 16
        %s225 = scalar_lea.vmem [#allocation2], %s224
        %p226 = pneg %p54
        %p227 = pneg %p51
        %p228 = pneg %p75
        %p229 = pneg %p72
        %p230 = pneg %p103
        %p231 = pneg %p100
        %p232 = scmp.lt.s32.totalorder %s23, 1
        %s233 = scalar_select %p232, %s23, 1
        %p234 = scmp.lt.s32.totalorder %s24, 0
        %s235 = scalar_select %p234, %s24, 0
        %s236 = sadd.s32 %s235, %s233
        %s237 = smul.addr %s236, 2
        %s238 = scalar_lea.vmem %s2, %s237
        %p239 = pneg %p131
        %p240 = pneg %p128
        %s241 = sadd.s32 %s23, %s24
        %p242 = scmp.lt.s32.totalorder %s241, 1
        %s243 = scalar_select %p242, %s241, 1
        %s244 = smul.addr %s243, 4
        %s245 = scalar_lea.vmem %s3, %s244
        %p246 = pneg %p159
        %p247 = pneg %p156
        %s248 = sadd.s32 %s23, %s24
        %p249 = scmp.lt.s32.totalorder %s248, 1
        %s250 = scalar_select %p249, %s248, 1
        %s251 = smul.addr %s250, 4
        %s252 = scalar_lea.vmem %s4, %s251
        %p253 = scmp.lt.s32.totalorder %s23, 1
        %s254 = scalar_select %p253, %s23, 1
        %p255 = scmp.lt.s32.totalorder %s24, 0
        %s256 = scalar_select %p255, %s24, 0
        %s257 = sadd.s32 %s256, %s254
        %s258 = smul.addr %s257, 2
        %s259 = scalar_lea.vmem %s2, %s258
        %s260 = sadd.s32 %s23, %s24
        %p261 = scmp.lt.s32.totalorder %s260, 1
        %s262 = scalar_select %p261, %s260, 1
        %s263 = smul.addr %s262, 4
        %s264 = scalar_lea.vmem %s3, %s263
        %s265 = sadd.s32 %s23, %s24
        %s266 = sadd.s32 %s23, %s24
        %p267 = scmp.lt.s32.totalorder %s266, 1
        %s268 = scalar_select %p267, %s266, 1
        %s269 = smul.addr %s268, 4
        %s270 = scalar_lea.vmem %s4, %s269
        %s271 = sadd.s32 %s23, %s24
        %v273 = vld [vmem:[%s1] sm:$0x3]
        %v274 = vld [vmem:[%s215] sm:$0xff]
        %v275 = vld [vmem:[%s215 + $0x8] sm:$0xff]
        %v276 = vpack.c.bf16 %v275, %v274
        %vm277 = vcmask 130048
        %v279 = vsel %vm277, %v273, 0
        %281 = vmatpush.bf16.msra.mxu0 0
        %282 = vmatpush.bf16.msra.mxu0 0
        %283 = vmatpush.bf16.msra.mxu0 0
        %284 = vmatpush.bf16.msra.mxu0 0
        %285 = vmatpush.bf16.msra.mxu0 0
        %286 = vmatpush.bf16.msra.mxu0 0
        %287 = vmatpush.bf16.msra.mxu0 0
        %288 = vmatpush.bf16.msra.mxu0 %v276
        %289 = vmatmul.bf16.gmra.mxu0 %v279
        %v290 = vpop.f32.mrf.mxu0
        %v291 = vadd.f32 0.0, %v290
        %v292 = vpop.f32.mrf.mxu0
        %293 = vdwg.mxu0
        %v294 = vpack.c.bf16 %v291, %v291
        %vm295 = vcmask 123904
        %296 = vst.msk [vmem:[%s259] sm:$0x3] %vm295, %v294
        %vm297 = vcmask 125952
        %v298 = vsel %vm297, %v291, 0.0
        %299 = vadd.xlane.f32.xlu0 %v298
        %v300 = vpop.xlane.xlu0 %299
        %vm301 = vcmask 3072
        %302 = vst.msk [vmem:[%s264] sm:$0xf] %vm301, %v300
        %v303 = vmul.f32 %v291, %v291
        %v304 = vsel %vm297, %v303, 0.0
        %305 = vadd.xlane.f32.xlu0 %v304
        %v306 = vpop.xlane.xlu0 %305
        %307 = vst.msk [vmem:[%s270] sm:$0xf] %vm301, %v306
        %p308 = scmp.lt.s32.totalorder %s23, 1
        %s309 = scalar_select %p308, %s23, 1
        %p310 = scmp.lt.s32.totalorder %s24, 0
        %s311 = scalar_select %p310, %s24, 0
        %s312 = sadd.s32 %s311, %s309
        %s313 = smul.addr %s312, 2
        %s314 = scalar_lea.vmem %s2, %s313
        %s315 = sadd.s32 %s23, %s24
        %p316 = scmp.lt.s32.totalorder %s315, 1
        %s317 = scalar_select %p316, %s315, 1
        %s318 = smul.addr %s317, 4
        %s319 = scalar_lea.vmem %s3, %s318
        %s320 = sadd.s32 %s23, %s24
        %p321 = scmp.lt.s32.totalorder %s320, 1
        %s322 = scalar_select %p321, %s320, 1
        %s323 = smul.addr %s322, 4
        %s324 = scalar_lea.vmem %s4, %s323
        // Predicated region
        $region33: #{bottleneck_forward.4} parent=27 // pred_check
          %p325 = pneg %p100
        $region34: #{bottleneck_forward.4} parent=27 // pred_check_branch
          %327 = sbr.rel (%p325) target = $region36
        $region35: #{bottleneck_forward.4} parent=27 // pred_region
          _
        $region36: #{bottleneck_forward.4} parent=27 // pred_fallthru
          _
        // Predicated region
        $region37: #{bottleneck_forward.4} parent=27 // pred_check
          %p328 = pneg %p128
        $region38: #{bottleneck_forward.4} parent=27 // pred_check_branch
          %330 = sbr.rel (%p328) target = $region40
        $region39: #{bottleneck_forward.4} parent=27 // pred_region
          %s331 = sadd.s32 %s23, %s24
        $region40: #{bottleneck_forward.4} parent=27 // pred_fallthru
          _
        // Predicated region
        $region41: #{bottleneck_forward.4} parent=27 // pred_check
          %p332 = pneg %p156
        $region42: #{bottleneck_forward.4} parent=27 // pred_check_branch
          %334 = sbr.rel (%p332) target = $region44
        $region43: #{bottleneck_forward.4} parent=27 // pred_region
          %s335 = sadd.s32 %s23, %s24
        $region44: #{bottleneck_forward.4} parent=27 // pred_fallthru
          _
      $region28: #{bottleneck_forward.4} parent=5 // pred_fallthru
        _
      %p336 = scmp.le.s32.totalorder 2, %s14
      // Predicated region
      $region45: #{bottleneck_forward.4} parent=5 // pred_check
        %p337 = pneg %p336
      $region46: #{bottleneck_forward.4} parent=5 // pred_check_branch
        %339 = sbr.rel (%p337) target = $region48
      $region47: #{bottleneck_forward.4} parent=5 // pred_region
        %s340 = ssub.s32 %s14, 2
        // Predicated region
        $region49: #{bottleneck_forward.4} parent=47 // pred_check
          %p341 = pneg %p106
        $region50: #{bottleneck_forward.4} parent=47 // pred_check_branch
          %343 = sbr.rel (%p341) target = $region52
        $region51: #{bottleneck_forward.4} parent=47 // pred_region
          %p344 = scmp.lt.s32.totalorder %s25, 1
          %s345 = scalar_select %p344, %s25, 1
          %p346 = scmp.lt.s32.totalorder %s26, 0
          %s347 = scalar_select %p346, %s26, 0
          %s348 = sadd.s32 %s347, %s345
          %s349 = smul.addr %s348, 2
          %s350 = scalar_lea.vmem %s2, %s349
        $region52: #{bottleneck_forward.4} parent=47 // pred_fallthru
          _
        // Predicated region
        $region53: #{bottleneck_forward.4} parent=47 // pred_check
          %p351 = pneg %p134
        $region54: #{bottleneck_forward.4} parent=47 // pred_check_branch
          %353 = sbr.rel (%p351) target = $region56
        $region55: #{bottleneck_forward.4} parent=47 // pred_region
          %s354 = sadd.s32 %s25, %s26
          %p355 = scmp.lt.s32.totalorder %s354, 1
          %s356 = scalar_select %p355, %s354, 1
          %s357 = smul.addr %s356, 4
          %s358 = scalar_lea.vmem %s3, %s357
        $region56: #{bottleneck_forward.4} parent=47 // pred_fallthru
          _
        // Predicated region
        $region57: #{bottleneck_forward.4} parent=47 // pred_check
          %p359 = pneg %p162
        $region58: #{bottleneck_forward.4} parent=47 // pred_check_branch
          %361 = sbr.rel (%p359) target = $region60
        $region59: #{bottleneck_forward.4} parent=47 // pred_region
          %s362 = sadd.s32 %s25, %s26
          %p363 = scmp.lt.s32.totalorder %s362, 1
          %s364 = scalar_select %p363, %s362, 1
          %s365 = smul.addr %s364, 4
          %s366 = scalar_lea.vmem %s4, %s365
        $region60: #{bottleneck_forward.4} parent=47 // pred_fallthru
          _
      $region48: #{bottleneck_forward.4} parent=5 // pred_fallthru
        _
    $region6: #{bottleneck_forward.4} parent=1 // loop_footer
      %s18 = sadd.s32 1, %s14
    $region7: #{bottleneck_forward.4} parent=1 // loop_footer_branch
      %13 = sbr.rel target = $region3
    $region8: #{bottleneck_forward.4} parent=1 // loop_exit
      _
    %367 = vsyncpa [#allocation3], 1
    %s368 = scalar_lea.sflag [#allocation3], 1
    %369 = vsyncpa %s368, 1

// kernel: bottleneck_forward.5
$region0: #{bottleneck_forward.5}
  #allocation0 [shape = 'u32[]', space=smem, size = 0x4, offset = 0x4, fixed_abs, tag = 'smem constant byte address 0x4 - core index']
  #allocation1 [shape = 'u32[72,128]{1,0:T(1,128)}', space=vmem, size = 0x9000, scoped, tag = 'internal scratch']
  %s0 = inlined_call_operand.vmem [shape: bf16[2,4,16], index: 0, kind: input, shape index: {}]
  %s1 = inlined_call_operand.vmem [shape: f32[4,1], index: 1, kind: input, shape index: {}]
  %s2 = inlined_call_operand.vmem [shape: f32[4,1], index: 2, kind: input, shape index: {}]
  %s3 = inlined_call_operand.vmem [shape: bf16[3,4,4], index: 3, kind: input, shape index: {}]
  %s4 = inlined_call_operand.vmem [shape: bf16[2,4,16], index: 4, kind: output, shape index: {0}]
  %s5 = inlined_call_operand.vmem [shape: f32[2,4,1], index: 5, kind: output, shape index: {1}]
  %s6 = inlined_call_operand.vmem [shape: f32[2,4,1], index: 6, kind: output, shape index: {2}]
  %7 = xla_tuple %s4, %s5, %s6
  %s8 = sld [smem:[#allocation0]]
  $region65: #{bottleneck_forward.5} parent=0
    _
  %s10 = ssub.s32 1, %s8
  %s11 = scalar_select 0, %s10, %s8
  loop: start=0, step=1, limit=4
  $region2: #{bottleneck_forward.5} parent=0 // loop_pre_header
    _
  $region3: #{bottleneck_forward.5} parent=0 // loop_header
    %s13 = sphi 0, %s17
    %p14 = scmp.ge.s32.totalorder %s13, 4
    %s23 = sphi 0, %s25
    %s26 = sphi 0, %s23
    %s27 = sphi 0, %s26
    %s43 = sphi 0, %s27
    %s47 = sphi 0, %s47
    %s49 = sphi 0, %s47
    %s50 = sphi 0, %s49
    %s64 = sphi 0, %s50
    %s68 = sphi 0, %s68
    %s70 = sphi 0, %s68
    %s71 = sphi 0, %s70
    %s85 = sphi 0, %s71
    %s89 = sphi 0, %s89
    %s91 = sphi 0, %s89
    %s92 = sphi 0, %s91
    %s106 = sphi 0, %s92
    %s112 = sphi 0, %s114
    %s115 = sphi 0, %s112
    %s116 = sphi 0, %s115
    %s132 = sphi 0, %s116
    %s138 = sphi 0, %s140
    %s141 = sphi 0, %s138
    %s142 = sphi 0, %s141
    %s158 = sphi 0, %s142
    %s164 = sphi 0, %s166
    %s167 = sphi 0, %s164
    %s168 = sphi 0, %s167
    %s184 = sphi 0, %s168
  $region4: #{bottleneck_forward.5} parent=0 // loop_header_branch
    %16 = sbr.rel (%p14) target = $region8
  $region5: #{bottleneck_forward.5} parent=0 // loop_body
    %s18 = ssub.s32 %s13, 1
    %s19 = ssub.s32 %s13, 2
    %s20 = sadd.s32 %s13, 1
    %s21 = ssub.s32 %s13, %s20
    %p22 = scmp.eq.s32.totalorder %s21, 0
    %s24 = sadd.s32 %s23, 1
    %s25 = scalar_select %p22, %s23, %s24
    %p28 = pneg %p22
    %p29 = scmp.eq.s32.totalorder %s13, 1
    %p30 = por %p28, %p29
    %p31 = scmp.ne.s32.totalorder %s23, %s26
    %p32 = scmp.eq.s32.totalorder %s13, 0
    %p33 = por %p31, %p32
    %p34 = scmp.ne.s32.totalorder %s23, %s26
    %p35 = scmp.eq.s32.totalorder %s18, 1
    %p36 = por %p34, %p35
    %p37 = scmp.ne.s32.totalorder %s26, %s27
    %p38 = scmp.eq.s32.totalorder %s18, 0
    %p39 = por %p37, %p38
    %p40 = scmp.ne.s32.totalorder %s26, %s27
    %p41 = scmp.eq.s32.totalorder %s19, 1
    %p42 = por %p40, %p41
    %p44 = scmp.ne.s32.totalorder %s27, %s43
    %p45 = scmp.eq.s32.totalorder %s19, 0
    %p46 = por %p44, %p45
    %s48 = sadd.s32 %s47, 1
    %p51 = scmp.eq.s32.totalorder %s13, 1
    %p52 = scmp.ne.s32.totalorder %s47, %s49
    %p53 = scmp.eq.s32.totalorder %s13, 0
    %p54 = por %p52, %p53
    %p55 = scmp.ne.s32.totalorder %s47, %s49
    %p56 = scmp.eq.s32.totalorder %s18, 1
    %p57 = por %p55, %p56
    %p58 = scmp.ne.s32.totalorder %s49, %s50
    %p59 = scmp.eq.s32.totalorder %s18, 0
    %p60 = por %p58, %p59
    %p61 = scmp.ne.s32.totalorder %s49, %s50
    %p62 = scmp.eq.s32.totalorder %s19, 1
    %p63 = por %p61, %p62
    %p65 = scmp.ne.s32.totalorder %s50, %s64
    %p66 = scmp.eq.s32.totalorder %s19, 0
    %p67 = por %p65, %p66
    %s69 = sadd.s32 %s68, 1
    %p72 = scmp.eq.s32.totalorder %s13, 1
    %p73 = scmp.ne.s32.totalorder %s68, %s70
    %p74 = scmp.eq.s32.totalorder %s13, 0
    %p75 = por %p73, %p74
    %p76 = scmp.ne.s32.totalorder %s68, %s70
    %p77 = scmp.eq.s32.totalorder %s18, 1
    %p78 = por %p76, %p77
    %p79 = scmp.ne.s32.totalorder %s70, %s71
    %p80 = scmp.eq.s32.totalorder %s18, 0
    %p81 = por %p79, %p80
    %p82 = scmp.ne.s32.totalorder %s70, %s71
    %p83 = scmp.eq.s32.totalorder %s19, 1
    %p84 = por %p82, %p83
    %p86 = scmp.ne.s32.totalorder %s71, %s85
    %p87 = scmp.eq.s32.totalorder %s19, 0
    %p88 = por %p86, %p87
    %s90 = sadd.s32 %s89, 1
    %p93 = scmp.eq.s32.totalorder %s13, 1
    %p94 = scmp.ne.s32.totalorder %s89, %s91
    %p95 = scmp.eq.s32.totalorder %s13, 0
    %p96 = por %p94, %p95
    %p97 = scmp.ne.s32.totalorder %s89, %s91
    %p98 = scmp.eq.s32.totalorder %s18, 1
    %p99 = por %p97, %p98
    %p100 = scmp.ne.s32.totalorder %s91, %s92
    %p101 = scmp.eq.s32.totalorder %s18, 0
    %p102 = por %p100, %p101
    %p103 = scmp.ne.s32.totalorder %s91, %s92
    %p104 = scmp.eq.s32.totalorder %s19, 1
    %p105 = por %p103, %p104
    %p107 = scmp.ne.s32.totalorder %s92, %s106
    %p108 = scmp.eq.s32.totalorder %s19, 0
    %p109 = por %p107, %p108
    %s110 = ssub.s32 %s13, %s20
    %p111 = scmp.eq.s32.totalorder %s110, 0
    %s113 = sadd.s32 %s112, 1
    %s114 = scalar_select %p111, %s112, %s113
    %p117 = pneg %p111
    %p118 = scmp.eq.s32.totalorder %s13, 1
    %p119 = por %p117, %p118
    %p120 = scmp.ne.s32.totalorder %s112, %s115
    %p121 = scmp.eq.s32.totalorder %s13, 0
    %p122 = por %p120, %p121
    %p123 = scmp.ne.s32.totalorder %s112, %s115
    %p124 = scmp.eq.s32.totalorder %s18, 1
    %p125 = por %p123, %p124
    %p126 = scmp.ne.s32.totalorder %s115, %s116
    %p127 = scmp.eq.s32.totalorder %s18, 0
    %p128 = por %p126, %p127
    %p129 = scmp.ne.s32.totalorder %s115, %s116
    %p130 = scmp.eq.s32.totalorder %s19, 1
    %p131 = por %p129, %p130
    %p133 = scmp.ne.s32.totalorder %s116, %s132
    %p134 = scmp.eq.s32.totalorder %s19, 0
    %p135 = por %p133, %p134
    %s136 = ssub.s32 %s13, %s20
    %p137 = scmp.eq.s32.totalorder %s136, 0
    %s139 = sadd.s32 %s138, 1
    %s140 = scalar_select %p137, %s138, %s139
    %p143 = pneg %p137
    %p144 = scmp.eq.s32.totalorder %s13, 1
    %p145 = por %p143, %p144
    %p146 = scmp.ne.s32.totalorder %s138, %s141
    %p147 = scmp.eq.s32.totalorder %s13, 0
    %p148 = por %p146, %p147
    %p149 = scmp.ne.s32.totalorder %s138, %s141
    %p150 = scmp.eq.s32.totalorder %s18, 1
    %p151 = por %p149, %p150
    %p152 = scmp.ne.s32.totalorder %s141, %s142
    %p153 = scmp.eq.s32.totalorder %s18, 0
    %p154 = por %p152, %p153
    %p155 = scmp.ne.s32.totalorder %s141, %s142
    %p156 = scmp.eq.s32.totalorder %s19, 1
    %p157 = por %p155, %p156
    %p159 = scmp.ne.s32.totalorder %s142, %s158
    %p160 = scmp.eq.s32.totalorder %s19, 0
    %p161 = por %p159, %p160
    %s162 = ssub.s32 %s13, %s20
    %p163 = scmp.eq.s32.totalorder %s162, 0
    %s165 = sadd.s32 %s164, 1
    %s166 = scalar_select %p163, %s164, %s165
    %p169 = pneg %p163
    %p170 = scmp.eq.s32.totalorder %s13, 1
    %p171 = por %p169, %p170
    %p172 = scmp.ne.s32.totalorder %s164, %s167
    %p173 = scmp.eq.s32.totalorder %s13, 0
    %p174 = por %p172, %p173
    %p175 = scmp.ne.s32.totalorder %s164, %s167
    %p176 = scmp.eq.s32.totalorder %s18, 1
    %p177 = por %p175, %p176
    %p178 = scmp.ne.s32.totalorder %s167, %s168
    %p179 = scmp.eq.s32.totalorder %s18, 0
    %p180 = por %p178, %p179
    %p181 = scmp.ne.s32.totalorder %s167, %s168
    %p182 = scmp.eq.s32.totalorder %s19, 1
    %p183 = por %p181, %p182
    %p185 = scmp.ne.s32.totalorder %s168, %s184
    %p186 = scmp.eq.s32.totalorder %s19, 0
    %p187 = por %p185, %p186
    %p188 = scmp.le.s32.totalorder 1, %s13
    %p189 = scmp.lt.s32.totalorder %s13, 3
    %p190 = pnand %p188, %p189
    %p191 = pneg %p190
    // Predicated region
    $region9: #{bottleneck_forward.5} parent=5 // pred_check
      _
    $region10: #{bottleneck_forward.5} parent=5 // pred_check_branch
      %193 = sbr.rel (%p190) target = $region12
    $region11: #{bottleneck_forward.5} parent=5 // pred_region
      %s194 = ssub.s32 %s13, 1
      // Predicated region
      $region13: #{bottleneck_forward.5} parent=11 // pred_check
        %p195 = pneg %p60
      $region14: #{bottleneck_forward.5} parent=11 // pred_check_branch
        %197 = sbr.rel (%p195) target = $region16
      $region15: #{bottleneck_forward.5} parent=11 // pred_region
        _
      $region16: #{bottleneck_forward.5} parent=11 // pred_fallthru
        _
      // Predicated region
      $region17: #{bottleneck_forward.5} parent=11 // pred_check
        %p198 = pneg %p81
      $region18: #{bottleneck_forward.5} parent=11 // pred_check_branch
        %200 = sbr.rel (%p198) target = $region20
      $region19: #{bottleneck_forward.5} parent=11 // pred_region
        _
      $region20: #{bottleneck_forward.5} parent=11 // pred_fallthru
        _
      // Predicated region
      $region21: #{bottleneck_forward.5} parent=11 // pred_check
        %p201 = pneg %p102
      $region22: #{bottleneck_forward.5} parent=11 // pred_check_branch
        %203 = sbr.rel (%p201) target = $region24
      $region23: #{bottleneck_forward.5} parent=11 // pred_region
        _
      $region24: #{bottleneck_forward.5} parent=11 // pred_fallthru
        _
    $region12: #{bottleneck_forward.5} parent=5 // pred_fallthru
      _
    %p204 = scmp.lt.s32.totalorder %s13, 2
    // Predicated region
    $region25: #{bottleneck_forward.5} parent=5 // pred_check
      %p205 = pneg %p204
    $region26: #{bottleneck_forward.5} parent=5 // pred_check_branch
      %207 = sbr.rel (%p205) target = $region28
    $region27: #{bottleneck_forward.5} parent=5 // pred_region
      // Predicated region
      $region29: #{bottleneck_forward.5} parent=27 // pred_check
        %p208 = pneg %p33
      $region30: #{bottleneck_forward.5} parent=27 // pred_check_branch
        %210 = sbr.rel (%p208) target = $region32
      $region31: #{bottleneck_forward.5} parent=27 // pred_region
        %p211 = scmp.lt.s32.totalorder %s13, 1
        %s212 = scalar_select %p211, %s13, 1
        %s213 = smul.addr %s212, 2
        %s214 = scalar_lea.vmem %s0, %s213
      $region32: #{bottleneck_forward.5} parent=27 // pred_fallthru
        _
    $region28: #{bottleneck_forward.5} parent=5 // pred_fallthru
      _
    %p215 = scmp.le.s32.totalorder 1, %s13
    %p216 = scmp.lt.s32.totalorder %s13, 3
    %p217 = pnand %p215, %p216
    %p218 = pneg %p217
    // Predicated region
    $region33: #{bottleneck_forward.5} parent=5 // pred_check
      _
    $region34: #{bottleneck_forward.5} parent=5 // pred_check_branch
      %220 = sbr.rel (%p217) target = $region36
    $region35: #{bottleneck_forward.5} parent=5 // pred_region
      %s221 = ssub.s32 %s13, 1
      %p222 = scmp.lt.s32.totalorder %s18, 1
      %s223 = scalar_select %p222, %s18, 1
      %s224 = smul.addr %s223, 2
      %s225 = scalar_lea.vmem %s0, %s224
      %p226 = pneg %p39
      %p227 = pneg %p36
      %p228 = pneg %p60
      %p229 = pneg %p57
      %p230 = pneg %p81
      %p231 = pneg %p78
      %p232 = pneg %p102
      %p233 = pneg %p99
      %p234 = pneg %p128
      %p235 = pneg %p125
      %p236 = scmp.lt.s32.totalorder %s18, 1
      %s237 = scalar_select %p236, %s18, 1
      %s238 = smul.addr %s237, 2
      %s239 = scalar_lea.vmem %s4, %s238
      %p240 = pneg %p154
      %p241 = pneg %p151
      %p242 = scmp.lt.s32.totalorder %s18, 1
      %s243 = scalar_select %p242, %s18, 1
      %s244 = smul.addr %s243, 4
      %s245 = scalar_lea.vmem %s5, %s244
      %p246 = pneg %p180
      %p247 = pneg %p177
      %p248 = scmp.lt.s32.totalorder %s18, 1
      %s249 = scalar_select %p248, %s18, 1
      %s250 = smul.addr %s249, 4
      %s251 = scalar_lea.vmem %s6, %s250
      %p252 = scmp.lt.s32.totalorder %s18, 1
      %s253 = scalar_select %p252, %s18, 1
      %s254 = smul.addr %s253, 2
      %s255 = scalar_lea.vmem %s0, %s254
      %p256 = scmp.lt.s32.totalorder %s18, 1
      %s257 = scalar_select %p256, %s18, 1
      %s258 = smul.addr %s257, 2
      %s259 = scalar_lea.vmem %s4, %s258
      %p260 = scmp.lt.s32.totalorder %s18, 1
      %s261 = scalar_select %p260, %s18, 1
      %s262 = smul.addr %s261, 4
      %s263 = scalar_lea.vmem %s5, %s262
      %p264 = scmp.lt.s32.totalorder %s18, 1
      %s265 = scalar_select %p264, %s18, 1
      %s266 = smul.addr %s265, 4
      %s267 = scalar_lea.vmem %s6, %s266
      %v269 = vld [vmem:[%s255] sm:$0x3]
      %v270 = vunpack.c.l.bf16 %v269
      %v271 = vld [vmem:[%s1] sm:$0xf]
      %273 = vset.pattern.permute.xlu0 0
      %274 = vperm.xlu0 %273, %v271
      %v275 = vpop.permute.xlu0 %274
      %v277 = vmul.f32 %v270, %v275
      %v278 = vld [vmem:[%s2] sm:$0xf]
      %280 = vset.pattern.permute.xlu0 0
      %281 = vperm.xlu0 %280, %v278
      %v282 = vpop.permute.xlu0 %281
      %v284 = vadd.f32 %v277, %v282
      %v285 = vmax.f32 %v284, 0.0
      %v286 = vpack.c.bf16 %v285, %v285
      %v287 = vld [vmem:[%s3] sm:$0x3]
      %vm288 = vcmask 31744
      %v290 = vsel %vm288, %v287, 0
      %vm292 = vcmask 1041408
      %v294 = vsel %vm292, %v286, 0
      %296 = vmatpush.bf16.msra.mxu0 0
      %297 = vmatpush.bf16.msra.mxu0 0
      %298 = vmatpush.bf16.msra.mxu0 0
      %299 = vmatpush.bf16.msra.mxu0 0
      %300 = vmatpush.bf16.msra.mxu0 0
      %301 = vmatpush.bf16.msra.mxu0 0
      %302 = vmatpush.bf16.msra.mxu0 0
      %303 = vmatpush.bf16.msra.mxu0 %v294
      %304 = vmatmul.bf16.gmra.mxu0 %v290
      %v305 = vpop.f32.mrf.mxu0
      %v306 = vadd.f32 0.0, %v305
      %v307 = vpop.f32.mrf.mxu0
      %308 = vdwg.mxu0
      %s309 = scalar_lea.vmem %s3, 2
      %v310 = vld [vmem:[%s309] sm:$0x3]
      %s311 = scalar_lea.vmem %s3, 4
      %v312 = vld [vmem:[%s311] sm:$0x3]
      %v314 = vsel %vm288, %v312, 0
      %316 = vmatpush.bf16.msra.mxu0 0
      %317 = vmatpush.bf16.msra.mxu0 0
      %318 = vmatpush.bf16.msra.mxu0 0
      %319 = vmatpush.bf16.msra.mxu0 0
      %320 = vmatpush.bf16.msra.mxu0 0
      %321 = vmatpush.bf16.msra.mxu0 0
      %322 = vmatpush.bf16.msra.mxu0 0
      %323 = vmatpush.bf16.msra.mxu0 %v294
      %324 = vmatmul.bf16.gmra.mxu0 %v314
      %v325 = vpop.f32.mrf.mxu0
      %v326 = vadd.f32 0.0, %v325
      %v327 = vpop.f32.mrf.mxu0
      %328 = vdwg.mxu0
      %330 = vrot.lane.b32.xlu0 %v306, 1
      %v331 = vpop.permute.xlu0 %330
      %vm333 = vcmask 7168
      %v334 = vsel %vm333, 0.0, %v331
      %336 = vrot.lane.b32.xlu0 %v326, 127
      %v337 = vpop.permute.xlu0 %336
      %vm339 = vcmask 121856
      %v340 = vsel %vm339, %v337, 0.0
      %v342 = vsel %vm288, %v310, 0
      %344 = vmatpush.bf16.msra.mxu0 0
      %345 = vmatpush.bf16.msra.mxu0 0
      %346 = vmatpush.bf16.msra.mxu0 0
      %347 = vmatpush.bf16.msra.mxu0 0
      %348 = vmatpush.bf16.msra.mxu0 0
      %349 = vmatpush.bf16.msra.mxu0 0
      %350 = vmatpush.bf16.msra.mxu0 0
      %351 = vmatpush.bf16.msra.mxu0 %v294
      %352 = vmatmul.bf16.gmra.mxu0 %v342
      %v353 = vpop.f32.mrf.mxu0
      %v354 = vadd.f32 %v334, %v353
      %v355 = vpop.f32.mrf.mxu0
      %356 = vdwg.mxu0
      %v357 = vadd.f32 %v354, %v340
      %v358 = vpack.c.bf16 %v357, %v357
      %vm359 = vcmask 123904
      %360 = vst.msk [vmem:[%s259] sm:$0x3] %vm359, %v358
      %vm361 = vcmask 125952
      %v362 = vsel %vm361, %v357, 0.0
      %363 = vadd.xlane.f32.xlu0 %v362
      %v364 = vpop.xlane.xlu0 %363
      %vm365 = vcmask 3072
      %366 = vst.msk [vmem:[%s263] sm:$0xf] %vm365, %v364
      %v367 = vmul.f32 %v357, %v357
      %v368 = vsel %vm361, %v367, 0.0
      %369 = vadd.xlane.f32.xlu0 %v368
      %v370 = vpop.xlane.xlu0 %369
      %371 = vst.msk [vmem:[%s267] sm:$0xf] %vm365, %v370
      %p372 = scmp.lt.s32.totalorder %s18, 1
      %s373 = scalar_select %p372, %s18, 1
      %s374 = smul.addr %s373, 2
      %s375 = scalar_lea.vmem %s4, %s374
      %p376 = scmp.lt.s32.totalorder %s18, 1
      %s377 = scalar_select %p376, %s18, 1
      %s378 = smul.addr %s377, 4
      %s379 = scalar_lea.vmem %s5, %s378
      %p380 = scmp.lt.s32.totalorder %s18, 1
      %s381 = scalar_select %p380, %s18, 1
      %s382 = smul.addr %s381, 4
      %s383 = scalar_lea.vmem %s6, %s382
      // Predicated region
      $region37: #{bottleneck_forward.5} parent=35 // pred_check
        %p384 = pneg %p125
      $region38: #{bottleneck_forward.5} parent=35 // pred_check_branch
        %386 = sbr.rel (%p384) target = $region40
      $region39: #{bottleneck_forward.5} parent=35 // pred_region
        _
      $region40: #{bottleneck_forward.5} parent=35 // pred_fallthru
        _
      // Predicated region
      $region41: #{bottleneck_forward.5} parent=35 // pred_check
        %p387 = pneg %p151
      $region42: #{bottleneck_forward.5} parent=35 // pred_check_branch
        %389 = sbr.rel (%p387) target = $region44
      $region43: #{bottleneck_forward.5} parent=35 // pred_region
        _
      $region44: #{bottleneck_forward.5} parent=35 // pred_fallthru
        _
      // Predicated region
      $region45: #{bottleneck_forward.5} parent=35 // pred_check
        %p390 = pneg %p177
      $region46: #{bottleneck_forward.5} parent=35 // pred_check_branch
        %392 = sbr.rel (%p390) target = $region48
      $region47: #{bottleneck_forward.5} parent=35 // pred_region
        _
      $region48: #{bottleneck_forward.5} parent=35 // pred_fallthru
        _
    $region36: #{bottleneck_forward.5} parent=5 // pred_fallthru
      _
    %p393 = scmp.le.s32.totalorder 2, %s13
    // Predicated region
    $region49: #{bottleneck_forward.5} parent=5 // pred_check
      %p394 = pneg %p393
    $region50: #{bottleneck_forward.5} parent=5 // pred_check_branch
      %396 = sbr.rel (%p394) target = $region52
    $region51: #{bottleneck_forward.5} parent=5 // pred_region
      %s397 = ssub.s32 %s13, 2
      // Predicated region
      $region53: #{bottleneck_forward.5} parent=51 // pred_check
        %p398 = pneg %p131
      $region54: #{bottleneck_forward.5} parent=51 // pred_check_branch
        %400 = sbr.rel (%p398) target = $region56
      $region55: #{bottleneck_forward.5} parent=51 // pred_region
        %p401 = scmp.lt.s32.totalorder %s19, 1
        %s402 = scalar_select %p401, %s19, 1
        %s403 = smul.addr %s402, 2
        %s404 = scalar_lea.vmem %s4, %s403
      $region56: #{bottleneck_forward.5} parent=51 // pred_fallthru
        _
      // Predicated region
      $region57: #{bottleneck_forward.5} parent=51 // pred_check
        %p405 = pneg %p157
      $region58: #{bottleneck_forward.5} parent=51 // pred_check_branch
        %407 = sbr.rel (%p405) target = $region60
      $region59: #{bottleneck_forward.5} parent=51 // pred_region
        %p408 = scmp.lt.s32.totalorder %s19, 1
        %s409 = scalar_select %p408, %s19, 1
        %s410 = smul.addr %s409, 4
        %s411 = scalar_lea.vmem %s5, %s410
      $region60: #{bottleneck_forward.5} parent=51 // pred_fallthru
        _
      // Predicated region
      $region61: #{bottleneck_forward.5} parent=51 // pred_check
        %p412 = pneg %p183
      $region62: #{bottleneck_forward.5} parent=51 // pred_check_branch
        %414 = sbr.rel (%p412) target = $region64
      $region63: #{bottleneck_forward.5} parent=51 // pred_region
        %p415 = scmp.lt.s32.totalorder %s19, 1
        %s416 = scalar_select %p415, %s19, 1
        %s417 = smul.addr %s416, 4
        %s418 = scalar_lea.vmem %s6, %s417
      $region64: #{bottleneck_forward.5} parent=51 // pred_fallthru
        _
    $region52: #{bottleneck_forward.5} parent=5 // pred_fallthru
      _
  $region6: #{bottleneck_forward.5} parent=0 // loop_footer
    %s17 = sadd.s32 1, %s13
  $region7: #{bottleneck_forward.5} parent=0 // loop_footer_branch
    %12 = sbr.rel target = $region3
  $region8: #{bottleneck_forward.5} parent=0 // loop_exit
    _

// kernel: bottleneck_forward.6
$region0: #{bottleneck_forward.6}
  #allocation0 [shape = 'u32[]', space=smem, size = 0x4, offset = 0x4, fixed_abs, tag = 'smem constant byte address 0x4 - core index']
  #allocation1 [shape = 'u32[72,128]{1,0:T(1,128)}', space=vmem, size = 0x9000, scoped, tag = 'internal scratch']
  %s0 = inlined_call_operand.vmem [shape: bf16[2,4,16], index: 0, kind: input, shape index: {}]
  %s1 = inlined_call_operand.vmem [shape: f32[4,1], index: 1, kind: input, shape index: {}]
  %s2 = inlined_call_operand.vmem [shape: f32[4,1], index: 2, kind: input, shape index: {}]
  %s3 = inlined_call_operand.vmem [shape: bf16[16,4], index: 3, kind: input, shape index: {}]
  %s4 = inlined_call_operand.vmem [shape: bf16[2,16,16], index: 4, kind: output, shape index: {0}]
  %s5 = inlined_call_operand.vmem [shape: f32[2,16,1], index: 5, kind: output, shape index: {1}]
  %s6 = inlined_call_operand.vmem [shape: f32[2,16,1], index: 6, kind: output, shape index: {2}]
  %7 = xla_tuple %s4, %s5, %s6
  %s8 = sld [smem:[#allocation0]]
  $region65: #{bottleneck_forward.6} parent=0
    _
  %s10 = ssub.s32 1, %s8
  %s11 = scalar_select 0, %s10, %s8
  loop: start=0, step=1, limit=4
  $region2: #{bottleneck_forward.6} parent=0 // loop_pre_header
    _
  $region3: #{bottleneck_forward.6} parent=0 // loop_header
    %s13 = sphi 0, %s17
    %p14 = scmp.ge.s32.totalorder %s13, 4
    %s20 = sphi 0, %s32
    %s21 = sphi 0, %s28
    %s22 = sphi 0, %s20
    %s23 = sphi 0, %s21
    %s24 = sphi 0, %s22
    %s25 = sphi 0, %s23
    %s37 = sphi 0, %s39
    %s40 = sphi 0, %s37
    %s41 = sphi 0, %s40
    %s57 = sphi 0, %s41
    %s61 = sphi 0, %s61
    %s63 = sphi 0, %s61
    %s64 = sphi 0, %s63
    %s78 = sphi 0, %s64
    %s82 = sphi 0, %s82
    %s84 = sphi 0, %s82
    %s85 = sphi 0, %s84
    %s99 = sphi 0, %s85
    %s103 = sphi 0, %s103
    %s105 = sphi 0, %s103
    %s106 = sphi 0, %s105
    %s120 = sphi 0, %s106
    %s128 = sphi 0, %s130
    %s131 = sphi 0, %s128
    %s132 = sphi 0, %s131
    %s148 = sphi 0, %s132
    %s156 = sphi 0, %s158
    %s159 = sphi 0, %s156
    %s160 = sphi 0, %s159
    %s176 = sphi 0, %s160
    %s184 = sphi 0, %s186
    %s187 = sphi 0, %s184
    %s188 = sphi 0, %s187
    %s204 = sphi 0, %s188
  $region4: #{bottleneck_forward.6} parent=0 // loop_header_branch
    %16 = sbr.rel (%p14) target = $region8
  $region5: #{bottleneck_forward.6} parent=0 // loop_body
    %s18 = ssub.s32 %s13, 1
    %s19 = ssub.s32 %s13, 2
    %s26 = sadd.s32 1, %s21
    %p27 = scmp.ge.s32.totalorder %s26, 1
    %s28 = scalar_select %p27, 0, %s26
    %s29 = sadd.s32 1, %s20
    %s30 = scalar_select %p27, %s29, %s20
    %p31 = scmp.ge.s32.totalorder %s30, 2
    %s32 = scalar_select %p31, 0, %s30
    %s33 = ssub.s32 %s20, %s32
    %s34 = ssub.s32 %s21, %s28
    %s35 = sor.u32 %s33, %s34
    %p36 = scmp.eq.s32.totalorder %s35, 0
    %s38 = sadd.s32 %s37, 1
    %s39 = scalar_select %p36, %s37, %s38
    %p42 = pneg %p36
    %p43 = scmp.eq.s32.totalorder %s13, 1
    %p44 = por %p42, %p43
    %p45 = scmp.ne.s32.totalorder %s37, %s40
    %p46 = scmp.eq.s32.totalorder %s13, 0
    %p47 = por %p45, %p46
    %p48 = scmp.ne.s32.totalorder %s37, %s40
    %p49 = scmp.eq.s32.totalorder %s18, 1
    %p50 = por %p48, %p49
    %p51 = scmp.ne.s32.totalorder %s40, %s41
    %p52 = scmp.eq.s32.totalorder %s18, 0
    %p53 = por %p51, %p52
    %p54 = scmp.ne.s32.totalorder %s40, %s41
    %p55 = scmp.eq.s32.totalorder %s19, 1
    %p56 = por %p54, %p55
    %p58 = scmp.ne.s32.totalorder %s41, %s57
    %p59 = scmp.eq.s32.totalorder %s19, 0
    %p60 = por %p58, %p59
    %s62 = sadd.s32 %s61, 1
    %p65 = scmp.eq.s32.totalorder %s13, 1
    %p66 = scmp.ne.s32.totalorder %s61, %s63
    %p67 = scmp.eq.s32.totalorder %s13, 0
    %p68 = por %p66, %p67
    %p69 = scmp.ne.s32.totalorder %s61, %s63
    %p70 = scmp.eq.s32.totalorder %s18, 1
    %p71 = por %p69, %p70
    %p72 = scmp.ne.s32.totalorder %s63, %s64
    %p73 = scmp.eq.s32.totalorder %s18, 0
    %p74 = por %p72, %p73
    %p75 = scmp.ne.s32.totalorder %s63, %s64
    %p76 = scmp.eq.s32.totalorder %s19, 1
    %p77 = por %p75, %p76
    %p79 = scmp.ne.s32.totalorder %s64, %s78
    %p80 = scmp.eq.s32.totalorder %s19, 0
    %p81 = por %p79, %p80
    %s83 = sadd.s32 %s82, 1
    %p86 = scmp.eq.s32.totalorder %s13, 1
    %p87 = scmp.ne.s32.totalorder %s82, %s84
    %p88 = scmp.eq.s32.totalorder %s13, 0
    %p89 = por %p87, %p88
    %p90 = scmp.ne.s32.totalorder %s82, %s84
    %p91 = scmp.eq.s32.totalorder %s18, 1
    %p92 = por %p90, %p91
    %p93 = scmp.ne.s32.totalorder %s84, %s85
    %p94 = scmp.eq.s32.totalorder %s18, 0
    %p95 = por %p93, %p94
    %p96 = scmp.ne.s32.totalorder %s84, %s85
    %p97 = scmp.eq.s32.totalorder %s19, 1
    %p98 = por %p96, %p97
    %p100 = scmp.ne.s32.totalorder %s85, %s99
    %p101 = scmp.eq.s32.totalorder %s19, 0
    %p102 = por %p100, %p101
    %s104 = sadd.s32 %s103, 1
    %p107 = scmp.eq.s32.totalorder %s13, 1
    %p108 = scmp.ne.s32.totalorder %s103, %s105
    %p109 = scmp.eq.s32.totalorder %s13, 0
    %p110 = por %p108, %p109
    %p111 = scmp.ne.s32.totalorder %s103, %s105
    %p112 = scmp.eq.s32.totalorder %s18, 1
    %p113 = por %p111, %p112
    %p114 = scmp.ne.s32.totalorder %s105, %s106
    %p115 = scmp.eq.s32.totalorder %s18, 0
    %p116 = por %p114, %p115
    %p117 = scmp.ne.s32.totalorder %s105, %s106
    %p118 = scmp.eq.s32.totalorder %s19, 1
    %p119 = por %p117, %p118
    %p121 = scmp.ne.s32.totalorder %s106, %s120
    %p122 = scmp.eq.s32.totalorder %s19, 0
    %p123 = por %p121, %p122
    %s124 = ssub.s32 %s20, %s32
    %s125 = ssub.s32 %s21, %s28
    %s126 = sor.u32 %s124, %s125
    %p127 = scmp.eq.s32.totalorder %s126, 0
    %s129 = sadd.s32 %s128, 1
    %s130 = scalar_select %p127, %s128, %s129
    %p133 = pneg %p127
    %p134 = scmp.eq.s32.totalorder %s13, 1
    %p135 = por %p133, %p134
    %p136 = scmp.ne.s32.totalorder %s128, %s131
    %p137 = scmp.eq.s32.totalorder %s13, 0
    %p138 = por %p136, %p137
    %p139 = scmp.ne.s32.totalorder %s128, %s131
    %p140 = scmp.eq.s32.totalorder %s18, 1
    %p141 = por %p139, %p140
    %p142 = scmp.ne.s32.totalorder %s131, %s132
    %p143 = scmp.eq.s32.totalorder %s18, 0
    %p144 = por %p142, %p143
    %p145 = scmp.ne.s32.totalorder %s131, %s132
    %p146 = scmp.eq.s32.totalorder %s19, 1
    %p147 = por %p145, %p146
    %p149 = scmp.ne.s32.totalorder %s132, %s148
    %p150 = scmp.eq.s32.totalorder %s19, 0
    %p151 = por %p149, %p150
    %s152 = sadd.s32 %s20, %s21
    %s153 = sadd.s32 %s32, %s28
    %s154 = ssub.s32 %s152, %s153
    %p155 = scmp.eq.s32.totalorder %s154, 0
    %s157 = sadd.s32 %s156, 1
    %s158 = scalar_select %p155, %s156, %s157
    %p161 = pneg %p155
    %p162 = scmp.eq.s32.totalorder %s13, 1
    %p163 = por %p161, %p162
    %p164 = scmp.ne.s32.totalorder %s156, %s159
    %p165 = scmp.eq.s32.totalorder %s13, 0
    %p166 = por %p164, %p165
    %p167 = scmp.ne.s32.totalorder %s156, %s159
    %p168 = scmp.eq.s32.totalorder %s18, 1
    %p169 = por %p167, %p168
    %p170 = scmp.ne.s32.totalorder %s159, %s160
    %p171 = scmp.eq.s32.totalorder %s18, 0
    %p172 = por %p170, %p171
    %p173 = scmp.ne.s32.totalorder %s159, %s160
    %p174 = scmp.eq.s32.totalorder %s19, 1
    %p175 = por %p173, %p174
    %p177 = scmp.ne.s32.totalorder %s160, %s176
    %p178 = scmp.eq.s32.totalorder %s19, 0
    %p179 = por %p177, %p178
    %s180 = sadd.s32 %s20, %s21
    %s181 = sadd.s32 %s32, %s28
    %s182 = ssub.s32 %s180, %s181
    %p183 = scmp.eq.s32.totalorder %s182, 0
    %s185 = sadd.s32 %s184, 1
    %s186 = scalar_select %p183, %s184, %s185
    %p189 = pneg %p183
    %p190 = scmp.eq.s32.totalorder %s13, 1
    %p191 = por %p189, %p190
    %p192 = scmp.ne.s32.totalorder %s184, %s187
    %p193 = scmp.eq.s32.totalorder %s13, 0
    %p194 = por %p192, %p193
    %p195 = scmp.ne.s32.totalorder %s184, %s187
    %p196 = scmp.eq.s32.totalorder %s18, 1
    %p197 = por %p195, %p196
    %p198 = scmp.ne.s32.totalorder %s187, %s188
    %p199 = scmp.eq.s32.totalorder %s18, 0
    %p200 = por %p198, %p199
    %p201 = scmp.ne.s32.totalorder %s187, %s188
    %p202 = scmp.eq.s32.totalorder %s19, 1
    %p203 = por %p201, %p202
    %p205 = scmp.ne.s32.totalorder %s188, %s204
    %p206 = scmp.eq.s32.totalorder %s19, 0
    %p207 = por %p205, %p206
    %p208 = scmp.le.s32.totalorder 1, %s13
    %p209 = scmp.lt.s32.totalorder %s13, 3
    %p210 = pnand %p208, %p209
    %p211 = pneg %p210
    // Predicated region
    $region9: #{bottleneck_forward.6} parent=5 // pred_check
      _
    $region10: #{bottleneck_forward.6} parent=5 // pred_check_branch
      %213 = sbr.rel (%p210) target = $region12
    $region11: #{bottleneck_forward.6} parent=5 // pred_region
      %s214 = ssub.s32 %s13, 1
      // Predicated region
      $region13: #{bottleneck_forward.6} parent=11 // pred_check
        %p215 = pneg %p74
      $region14: #{bottleneck_forward.6} parent=11 // pred_check_branch
        %217 = sbr.rel (%p215) target = $region16
      $region15: #{bottleneck_forward.6} parent=11 // pred_region
        _
      $region16: #{bottleneck_forward.6} parent=11 // pred_fallthru
        _
      // Predicated region
      $region17: #{bottleneck_forward.6} parent=11 // pred_check
        %p218 = pneg %p95
      $region18: #{bottleneck_forward.6} parent=11 // pred_check_branch
        %220 = sbr.rel (%p218) target = $region20
      $region19: #{bottleneck_forward.6} parent=11 // pred_region
        _
      $region20: #{bottleneck_forward.6} parent=11 // pred_fallthru
        _
      // Predicated region
      $region21: #{bottleneck_forward.6} parent=11 // pred_check
        %p221 = pneg %p116
      $region22: #{bottleneck_forward.6} parent=11 // pred_check_branch
        %223 = sbr.rel (%p221) target = $region24
      $region23: #{bottleneck_forward.6} parent=11 // pred_region
        _
      $region24: #{bottleneck_forward.6} parent=11 // pred_fallthru
        _
    $region12: #{bottleneck_forward.6} parent=5 // pred_fallthru
      _
    %p224 = scmp.lt.s32.totalorder %s13, 2
    // Predicated region
    $region25: #{bottleneck_forward.6} parent=5 // pred_check
      %p225 = pneg %p224
    $region26: #{bottleneck_forward.6} parent=5 // pred_check_branch
      %227 = sbr.rel (%p225) target = $region28
    $region27: #{bottleneck_forward.6} parent=5 // pred_region
      // Predicated region
      $region29: #{bottleneck_forward.6} parent=27 // pred_check
        %p228 = pneg %p47
      $region30: #{bottleneck_forward.6} parent=27 // pred_check_branch
        %230 = sbr.rel (%p228) target = $region32
      $region31: #{bottleneck_forward.6} parent=27 // pred_region
        %p231 = scmp.lt.s32.totalorder %s20, 1
        %s232 = scalar_select %p231, %s20, 1
        %p233 = scmp.lt.s32.totalorder %s21, 0
        %s234 = scalar_select %p233, %s21, 0
        %s235 = sadd.s32 %s234, %s232
        %s236 = smul.addr %s235, 2
        %s237 = scalar_lea.vmem %s0, %s236
      $region32: #{bottleneck_forward.6} parent=27 // pred_fallthru
        _
    $region28: #{bottleneck_forward.6} parent=5 // pred_fallthru
      _
    %p238 = scmp.le.s32.totalorder 1, %s13
    %p239 = scmp.lt.s32.totalorder %s13, 3
    %p240 = pnand %p238, %p239
    %p241 = pneg %p240
    // Predicated region
    $region33: #{bottleneck_forward.6} parent=5 // pred_check
      _
    $region34: #{bottleneck_forward.6} parent=5 // pred_check_branch
      %243 = sbr.rel (%p240) target = $region36
    $region35: #{bottleneck_forward.6} parent=5 // pred_region
      %s244 = ssub.s32 %s13, 1
      %p245 = scmp.lt.s32.totalorder %s22, 1
      %s246 = scalar_select %p245, %s22, 1
      %p247 = scmp.lt.s32.totalorder %s23, 0
      %s248 = scalar_select %p247, %s23, 0
      %s249 = sadd.s32 %s248, %s246
      %s250 = smul.addr %s249, 2
      %s251 = scalar_lea.vmem %s0, %s250
      %p252 = pneg %p53
      %p253 = pneg %p50
      %p254 = pneg %p74
      %p255 = pneg %p71
      %p256 = pneg %p95
      %p257 = pneg %p92
      %p258 = pneg %p116
      %p259 = pneg %p113
      %p260 = pneg %p144
      %p261 = pneg %p141
      %p262 = scmp.lt.s32.totalorder %s22, 1
      %s263 = scalar_select %p262, %s22, 1
      %p264 = scmp.lt.s32.totalorder %s23, 0
      %s265 = scalar_select %p264, %s23, 0
      %s266 = smul.addr %s263, 2
      %s267 = sadd.s32 %s265, %s266
      %s268 = smul.addr %s267, 4
      %s269 = scalar_lea.vmem %s4, %s268
      %p270 = pneg %p172
      %p271 = pneg %p169
      %s272 = sadd.s32 %s22, %s23
      %p273 = scmp.lt.s32.totalorder %s272, 1
      %s274 = scalar_select %p273, %s272, 1
      %s275 = smul.addr %s274, 2
      %s276 = smul.addr %s275, 8
      %s277 = scalar_lea.vmem %s5, %s276
      %p278 = pneg %p200
      %p279 = pneg %p197
      %s280 = sadd.s32 %s22, %s23
      %p281 = scmp.lt.s32.totalorder %s280, 1
      %s282 = scalar_select %p281, %s280, 1
      %s283 = smul.addr %s282, 2
      %s284 = smul.addr %s283, 8
      %s285 = scalar_lea.vmem %s6, %s284
      %p286 = scmp.lt.s32.totalorder %s22, 1
      %s287 = scalar_select %p286, %s22, 1
      %p288 = scmp.lt.s32.totalorder %s23, 0
      %s289 = scalar_select %p288, %s23, 0
      %s290 = sadd.s32 %s289, %s287
      %s291 = smul.addr %s290, 2
      %s292 = scalar_lea.vmem %s0, %s291
      %p293 = scmp.lt.s32.totalorder %s22, 1
      %s294 = scalar_select %p293, %s22, 1
      %p295 = scmp.lt.s32.totalorder %s23, 0
      %s296 = scalar_select %p295, %s23, 0
      %s297 = smul.addr %s294, 2
      %s298 = sadd.s32 %s296, %s297
      %s299 = smul.addr %s298, 4
      %s300 = scalar_lea.vmem %s4, %s299
      %s301 = sadd.s32 %s22, %s23
      %p302 = scmp.lt.s32.totalorder %s301, 1
      %s303 = scalar_select %p302, %s301, 1
      %s304 = smul.addr %s303, 2
      %s305 = smul.addr %s304, 8
      %s306 = scalar_lea.vmem %s5, %s305
      %s307 = sadd.s32 %s22, %s23
      %s308 = sadd.s32 %s22, %s23
      %p309 = scmp.lt.s32.totalorder %s308, 1
      %s310 = scalar_select %p309, %s308, 1
      %s311 = smul.addr %s310, 2
      %s312 = smul.addr %s311, 8
      %s313 = scalar_lea.vmem %s6, %s312
      %s314 = sadd.s32 %s22, %s23
      %v316 = vld [vmem:[%s292] sm:$0x3]
      %v317 = vunpack.c.l.bf16 %v316
      %v318 = vld [vmem:[%s1] sm:$0xf]
      %320 = vset.pattern.permute.xlu0 0
      %321 = vperm.xlu0 %320, %v318
      %v322 = vpop.permute.xlu0 %321
      %v324 = vmul.f32 %v317, %v322
      %v325 = vld [vmem:[%s2] sm:$0xf]
      %327 = vset.pattern.permute.xlu0 0
      %328 = vperm.xlu0 %327, %v325
      %v329 = vpop.permute.xlu0 %328
      %v331 = vadd.f32 %v324, %v329
      %v332 = vmax.f32 %v331, 0.0
      %v333 = vld [vmem:[%s3] sm:$0xf]
      %v334 = vld [vmem:[%s3 + $0x4] sm:$0xf]
      %v335 = vpack.c.bf16 %v332, %v332
      %v338 = vunpack.c.l.b16 %v333
      %v339 = vunpack.c.l.b16 %v334
      %v340 = vpack.c.b16 %v339, %v338
      %vm341 = vcmask 31744
      %v343 = vsel %vm341, %v340, 0
      %vm345 = vcmask 1041408
      %v347 = vsel %vm345, %v335, 0
      %349 = vmatpush.bf16.msra.mxu0 0
      %350 = vmatpush.bf16.msra.mxu0 0
      %351 = vmatpush.bf16.msra.mxu0 0
      %352 = vmatpush.bf16.msra.mxu0 0
      %353 = vmatpush.bf16.msra.mxu0 0
      %354 = vmatpush.bf16.msra.mxu0 0
      %355 = vmatpush.bf16.msra.mxu0 0
      %356 = vmatpush.bf16.msra.mxu0 %v347
      %357 = vmatmul.bf16.gmra.mxu0 %v343
      %v358 = vpop.f32.mrf.mxu0
      %v359 = vadd.f32 0.0, %v358
      %v360 = vpop.f32.mrf.mxu0
      %v361 = vadd.f32 0.0, %v360
      %362 = vdwg.mxu0
      %v363 = vpack.c.bf16 %v359, %v359
      %v364 = vpack.c.bf16 %v361, %v361
      %vm365 = vcmask 125952
      %366 = vst.msk [vmem:[%s300] sm:$0xf] %vm365, %v363
      %367 = vst.msk [vmem:[%s300 + $0x4] sm:$0xf] %vm365, %v364
      %vm368 = vcmask 130048
      %v369 = vsel %vm368, %v359, 0.0
      %370 = vadd.xlane.f32.xlu0 %v369
      %v371 = vpop.xlane.xlu0 %370
      %v372 = vsel %vm368, %v361, 0.0
      %373 = vadd.xlane.f32.xlu0 %v372
      %v374 = vpop.xlane.xlu0 %373
      %vm375 = vcmask 7168
      %376 = vst.msk [vmem:[%s306] sm:$0xff] %vm375, %v371
      %377 = vst.msk [vmem:[%s306 + $0x8] sm:$0xff] %vm375, %v374
      %v378 = vmul.f32 %v359, %v359
      %v379 = vmul.f32 %v361, %v361
      %v380 = vsel %vm368, %v378, 0.0
      %381 = vadd.xlane.f32.xlu0 %v380
      %v382 = vpop.xlane.xlu0 %381
      %v383 = vsel %vm368, %v379, 0.0
      %384 = vadd.xlane.f32.xlu0 %v383
      %v385 = vpop.xlane.xlu0 %384
      %386 = vst.msk [vmem:[%s313] sm:$0xff] %vm375, %v382
      %387 = vst.msk [vmem:[%s313 + $0x8] sm:$0xff] %vm375, %v385
      %p388 = scmp.lt.s32.totalorder %s22, 1
      %s389 = scalar_select %p388, %s22, 1
      %p390 = scmp.lt.s32.totalorder %s23, 0
      %s391 = scalar_select %p390, %s23, 0
      %s392 = smul.addr %s389, 2
      %s393 = sadd.s32 %s391, %s392
      %s394 = smul.addr %s393, 4
      %s395 = scalar_lea.vmem %s4, %s394
      %s396 = sadd.s32 %s22, %s23
      %p397 = scmp.lt.s32.totalorder %s396, 1
      %s398 = scalar_select %p397, %s396, 1
      %s399 = smul.addr %s398, 2
      %s400 = smul.addr %s399, 8
      %s401 = scalar_lea.vmem %s5, %s400
      %s402 = sadd.s32 %s22, %s23
      %p403 = scmp.lt.s32.totalorder %s402, 1
      %s404 = scalar_select %p403, %s402, 1
      %s405 = smul.addr %s404, 2
      %s406 = smul.addr %s405, 8
      %s407 = scalar_lea.vmem %s6, %s406
      // Predicated region
      $region37: #{bottleneck_forward.6} parent=35 // pred_check
        %p408 = pneg %p141
      $region38: #{bottleneck_forward.6} parent=35 // pred_check_branch
        %410 = sbr.rel (%p408) target = $region40
      $region39: #{bottleneck_forward.6} parent=35 // pred_region
        _
      $region40: #{bottleneck_forward.6} parent=35 // pred_fallthru
        _
      // Predicated region
      $region41: #{bottleneck_forward.6} parent=35 // pred_check
        %p411 = pneg %p169
      $region42: #{bottleneck_forward.6} parent=35 // pred_check_branch
        %413 = sbr.rel (%p411) target = $region44
      $region43: #{bottleneck_forward.6} parent=35 // pred_region
        %s414 = sadd.s32 %s22, %s23
      $region44: #{bottleneck_forward.6} parent=35 // pred_fallthru
        _
      // Predicated region
      $region45: #{bottleneck_forward.6} parent=35 // pred_check
        %p415 = pneg %p197
      $region46: #{bottleneck_forward.6} parent=35 // pred_check_branch
        %417 = sbr.rel (%p415) target = $region48
      $region47: #{bottleneck_forward.6} parent=35 // pred_region
        %s418 = sadd.s32 %s22, %s23
      $region48: #{bottleneck_forward.6} parent=35 // pred_fallthru
        _
    $region36: #{bottleneck_forward.6} parent=5 // pred_fallthru
      _
    %p419 = scmp.le.s32.totalorder 2, %s13
    // Predicated region
    $region49: #{bottleneck_forward.6} parent=5 // pred_check
      %p420 = pneg %p419
    $region50: #{bottleneck_forward.6} parent=5 // pred_check_branch
      %422 = sbr.rel (%p420) target = $region52
    $region51: #{bottleneck_forward.6} parent=5 // pred_region
      %s423 = ssub.s32 %s13, 2
      // Predicated region
      $region53: #{bottleneck_forward.6} parent=51 // pred_check
        %p424 = pneg %p147
      $region54: #{bottleneck_forward.6} parent=51 // pred_check_branch
        %426 = sbr.rel (%p424) target = $region56
      $region55: #{bottleneck_forward.6} parent=51 // pred_region
        %p427 = scmp.lt.s32.totalorder %s24, 1
        %s428 = scalar_select %p427, %s24, 1
        %p429 = scmp.lt.s32.totalorder %s25, 0
        %s430 = scalar_select %p429, %s25, 0
        %s431 = smul.addr %s428, 2
        %s432 = sadd.s32 %s430, %s431
        %s433 = smul.addr %s432, 4
        %s434 = scalar_lea.vmem %s4, %s433
      $region56: #{bottleneck_forward.6} parent=51 // pred_fallthru
        _
      // Predicated region
      $region57: #{bottleneck_forward.6} parent=51 // pred_check
        %p435 = pneg %p175
      $region58: #{bottleneck_forward.6} parent=51 // pred_check_branch
        %437 = sbr.rel (%p435) target = $region60
      $region59: #{bottleneck_forward.6} parent=51 // pred_region
        %s438 = sadd.s32 %s24, %s25
        %p439 = scmp.lt.s32.totalorder %s438, 1
        %s440 = scalar_select %p439, %s438, 1
        %s441 = smul.addr %s440, 2
        %s442 = smul.addr %s441, 8
        %s443 = scalar_lea.vmem %s5, %s442
      $region60: #{bottleneck_forward.6} parent=51 // pred_fallthru
        _
      // Predicated region
      $region61: #{bottleneck_forward.6} parent=51 // pred_check
        %p444 = pneg %p203
      $region62: #{bottleneck_forward.6} parent=51 // pred_check_branch
        %446 = sbr.rel (%p444) target = $region64
      $region63: #{bottleneck_forward.6} parent=51 // pred_region
        %s447 = sadd.s32 %s24, %s25
        %p448 = scmp.lt.s32.totalorder %s447, 1
        %s449 = scalar_select %p448, %s447, 1
        %s450 = smul.addr %s449, 2
        %s451 = smul.addr %s450, 8
        %s452 = scalar_lea.vmem %s6, %s451
      $region64: #{bottleneck_forward.6} parent=51 // pred_fallthru
        _
    $region52: #{bottleneck_forward.6} parent=5 // pred_fallthru
      _
  $region6: #{bottleneck_forward.6} parent=0 // loop_footer
    %s17 = sadd.s32 1, %s13
  $region7: #{bottleneck_forward.6} parent=0 // loop_footer_branch
    %12 = sbr.rel target = $region3
  $region8: #{bottleneck_forward.6} parent=0 // loop_exit
    _

// kernel: bottleneck_forward.7
$region0: #{bottleneck_forward.7}
  #allocation0 [shape = 'u32[]', space=smem, size = 0x4, offset = 0x4, fixed_abs, tag = 'smem constant byte address 0x4 - core index']
  #allocation1 [shape = 'u32[72,128]{1,0:T(1,128)}', space=vmem, size = 0x9000, scoped, tag = 'internal scratch']
  %s0 = inlined_call_operand.vmem [shape: bf16[2,16,16], index: 0, kind: input, shape index: {}]
  %s1 = inlined_call_operand.vmem [shape: f32[2,16,16], index: 1, kind: input, shape index: {}]
  %s2 = inlined_call_operand.vmem [shape: f32[16,1], index: 2, kind: input, shape index: {}]
  %s3 = inlined_call_operand.vmem [shape: f32[16,1], index: 3, kind: input, shape index: {}]
  %s4 = inlined_call_operand.hbm [shape: f32[2,16,16], index: 4, kind: output, shape index: {}]
  %s5 = sld [smem:[#allocation0]]
  $region49: #{bottleneck_forward.7} parent=0
    _
  %s7 = ssub.s32 1, %s5
  %s8 = scalar_select 0, %s7, %s5
  $region1: #{bottleneck_forward.7} parent=0
    #allocation2 [shape = 'u8[16384]{0}', space=vmem, size = 0x4000, scoped, tag = 'output window, operand 0']
    #allocation3 [shape = 's32[2]{0}', space=sflag, size = 0x8, scoped, tag = 'scoped memory for bottleneck_forward.7']
    %9 = vsyncpa [#allocation3], 0
    %s10 = scalar_lea.sflag [#allocation3], 1
    %11 = vsyncpa %s10, 0
    loop: start=0, step=1, limit=4
    $region2: #{bottleneck_forward.7} parent=1 // loop_pre_header
      _
    $region3: #{bottleneck_forward.7} parent=1 // loop_header
      %s13 = sphi 0, %s17
      %p14 = scmp.ge.s32.totalorder %s13, 4
      %s20 = sphi 0, %s32
      %s21 = sphi 0, %s28
      %s22 = sphi 0, %s20
      %s23 = sphi 0, %s21
      %s24 = sphi 0, %s22
      %s25 = sphi 0, %s23
      %s37 = sphi 0, %s39
      %s40 = sphi 0, %s37
      %s41 = sphi 0, %s40
      %s57 = sphi 0, %s41
      %s65 = sphi 0, %s67
      %s68 = sphi 0, %s65
      %s69 = sphi 0, %s68
      %s85 = sphi 0, %s69
      %s89 = sphi 0, %s89
      %s91 = sphi 0, %s89
      %s92 = sphi 0, %s91
      %s106 = sphi 0, %s92
      %s110 = sphi 0, %s110
      %s112 = sphi 0, %s110
      %s113 = sphi 0, %s112
      %s127 = sphi 0, %s113
      %s135 = sphi 0, %s137
      %s138 = sphi 0, %s135
      %s139 = sphi 0, %s138
      %s155 = sphi 0, %s139
    $region4: #{bottleneck_forward.7} parent=1 // loop_header_branch
      %16 = sbr.rel (%p14) target = $region8
    $region5: #{bottleneck_forward.7} parent=1 // loop_body
      %s18 = ssub.s32 %s13, 1
      %s19 = ssub.s32 %s13, 2
      %s26 = sadd.s32 1, %s21
      %p27 = scmp.ge.s32.totalorder %s26, 1
      %s28 = scalar_select %p27, 0, %s26
      %s29 = sadd.s32 1, %s20
      %s30 = scalar_select %p27, %s29, %s20
      %p31 = scmp.ge.s32.totalorder %s30, 2
      %s32 = scalar_select %p31, 0, %s30
      %s33 = ssub.s32 %s20, %s32
      %s34 = ssub.s32 %s21, %s28
      %s35 = sor.u32 %s33, %s34
      %p36 = scmp.eq.s32.totalorder %s35, 0
      %s38 = sadd.s32 %s37, 1
      %s39 = scalar_select %p36, %s37, %s38
      %p42 = pneg %p36
      %p43 = scmp.eq.s32.totalorder %s13, 1
      %p44 = por %p42, %p43
      %p45 = scmp.ne.s32.totalorder %s37, %s40
      %p46 = scmp.eq.s32.totalorder %s13, 0
      %p47 = por %p45, %p46
      %p48 = scmp.ne.s32.totalorder %s37, %s40
      %p49 = scmp.eq.s32.totalorder %s18, 1
      %p50 = por %p48, %p49
      %p51 = scmp.ne.s32.totalorder %s40, %s41
      %p52 = scmp.eq.s32.totalorder %s18, 0
      %p53 = por %p51, %p52
      %p54 = scmp.ne.s32.totalorder %s40, %s41
      %p55 = scmp.eq.s32.totalorder %s19, 1
      %p56 = por %p54, %p55
      %p58 = scmp.ne.s32.totalorder %s41, %s57
      %p59 = scmp.eq.s32.totalorder %s19, 0
      %p60 = por %p58, %p59
      %s61 = ssub.s32 %s20, %s32
      %s62 = ssub.s32 %s21, %s28
      %s63 = sor.u32 %s61, %s62
      %p64 = scmp.eq.s32.totalorder %s63, 0
      %s66 = sadd.s32 %s65, 1
      %s67 = scalar_select %p64, %s65, %s66
      %p70 = pneg %p64
      %p71 = scmp.eq.s32.totalorder %s13, 1
      %p72 = por %p70, %p71
      %p73 = scmp.ne.s32.totalorder %s65, %s68
      %p74 = scmp.eq.s32.totalorder %s13, 0
      %p75 = por %p73, %p74
      %p76 = scmp.ne.s32.totalorder %s65, %s68
      %p77 = scmp.eq.s32.totalorder %s18, 1
      %p78 = por %p76, %p77
      %p79 = scmp.ne.s32.totalorder %s68, %s69
      %p80 = scmp.eq.s32.totalorder %s18, 0
      %p81 = por %p79, %p80
      %p82 = scmp.ne.s32.totalorder %s68, %s69
      %p83 = scmp.eq.s32.totalorder %s19, 1
      %p84 = por %p82, %p83
      %p86 = scmp.ne.s32.totalorder %s69, %s85
      %p87 = scmp.eq.s32.totalorder %s19, 0
      %p88 = por %p86, %p87
      %s90 = sadd.s32 %s89, 1
      %p93 = scmp.eq.s32.totalorder %s13, 1
      %p94 = scmp.ne.s32.totalorder %s89, %s91
      %p95 = scmp.eq.s32.totalorder %s13, 0
      %p96 = por %p94, %p95
      %p97 = scmp.ne.s32.totalorder %s89, %s91
      %p98 = scmp.eq.s32.totalorder %s18, 1
      %p99 = por %p97, %p98
      %p100 = scmp.ne.s32.totalorder %s91, %s92
      %p101 = scmp.eq.s32.totalorder %s18, 0
      %p102 = por %p100, %p101
      %p103 = scmp.ne.s32.totalorder %s91, %s92
      %p104 = scmp.eq.s32.totalorder %s19, 1
      %p105 = por %p103, %p104
      %p107 = scmp.ne.s32.totalorder %s92, %s106
      %p108 = scmp.eq.s32.totalorder %s19, 0
      %p109 = por %p107, %p108
      %s111 = sadd.s32 %s110, 1
      %p114 = scmp.eq.s32.totalorder %s13, 1
      %p115 = scmp.ne.s32.totalorder %s110, %s112
      %p116 = scmp.eq.s32.totalorder %s13, 0
      %p117 = por %p115, %p116
      %p118 = scmp.ne.s32.totalorder %s110, %s112
      %p119 = scmp.eq.s32.totalorder %s18, 1
      %p120 = por %p118, %p119
      %p121 = scmp.ne.s32.totalorder %s112, %s113
      %p122 = scmp.eq.s32.totalorder %s18, 0
      %p123 = por %p121, %p122
      %p124 = scmp.ne.s32.totalorder %s112, %s113
      %p125 = scmp.eq.s32.totalorder %s19, 1
      %p126 = por %p124, %p125
      %p128 = scmp.ne.s32.totalorder %s113, %s127
      %p129 = scmp.eq.s32.totalorder %s19, 0
      %p130 = por %p128, %p129
      %s131 = ssub.s32 %s20, %s32
      %s132 = ssub.s32 %s21, %s28
      %s133 = sor.u32 %s131, %s132
      %p134 = scmp.eq.s32.totalorder %s133, 0
      %s136 = sadd.s32 %s135, 1
      %s137 = scalar_select %p134, %s135, %s136
      %p140 = pneg %p134
      %p141 = scmp.eq.s32.totalorder %s13, 1
      %p142 = por %p140, %p141
      %p143 = scmp.ne.s32.totalorder %s135, %s138
      %p144 = scmp.eq.s32.totalorder %s13, 0
      %p145 = por %p143, %p144
      %p146 = scmp.ne.s32.totalorder %s135, %s138
      %p147 = scmp.eq.s32.totalorder %s18, 1
      %p148 = por %p146, %p147
      %p149 = scmp.ne.s32.totalorder %s138, %s139
      %p150 = scmp.eq.s32.totalorder %s18, 0
      %p151 = por %p149, %p150
      %p152 = scmp.ne.s32.totalorder %s138, %s139
      %p153 = scmp.eq.s32.totalorder %s19, 1
      %p154 = por %p152, %p153
      %p156 = scmp.ne.s32.totalorder %s139, %s155
      %p157 = scmp.eq.s32.totalorder %s19, 0
      %p158 = por %p156, %p157
      %p159 = scmp.le.s32.totalorder 1, %s13
      %p160 = scmp.lt.s32.totalorder %s13, 3
      %p161 = pnand %p159, %p160
      %p162 = pneg %p161
      // Predicated region
      $region9: #{bottleneck_forward.7} parent=5 // pred_check
        _
      $region10: #{bottleneck_forward.7} parent=5 // pred_check_branch
        %164 = sbr.rel (%p161) target = $region12
      $region11: #{bottleneck_forward.7} parent=5 // pred_region
        %s165 = ssub.s32 %s13, 1
        // Predicated region
        $region13: #{bottleneck_forward.7} parent=11 // pred_check
          %p166 = pneg %p102
        $region14: #{bottleneck_forward.7} parent=11 // pred_check_branch
          %168 = sbr.rel (%p166) target = $region16
        $region15: #{bottleneck_forward.7} parent=11 // pred_region
          _
        $region16: #{bottleneck_forward.7} parent=11 // pred_fallthru
          _
        // Predicated region
        $region17: #{bottleneck_forward.7} parent=11 // pred_check
          %p169 = pneg %p123
        $region18: #{bottleneck_forward.7} parent=11 // pred_check_branch
          %171 = sbr.rel (%p169) target = $region20
        $region19: #{bottleneck_forward.7} parent=11 // pred_region
          _
        $region20: #{bottleneck_forward.7} parent=11 // pred_fallthru
          _
      $region12: #{bottleneck_forward.7} parent=5 // pred_fallthru
        _
      %p172 = scmp.lt.s32.totalorder %s13, 2
      // Predicated region
      $region21: #{bottleneck_forward.7} parent=5 // pred_check
        %p173 = pneg %p172
      $region22: #{bottleneck_forward.7} parent=5 // pred_check_branch
        %175 = sbr.rel (%p173) target = $region24
      $region23: #{bottleneck_forward.7} parent=5 // pred_region
        // Predicated region
        $region25: #{bottleneck_forward.7} parent=23 // pred_check
          %p176 = pneg %p47
        $region26: #{bottleneck_forward.7} parent=23 // pred_check_branch
          %178 = sbr.rel (%p176) target = $region28
        $region27: #{bottleneck_forward.7} parent=23 // pred_region
          %p179 = scmp.lt.s32.totalorder %s20, 1
          %s180 = scalar_select %p179, %s20, 1
          %p181 = scmp.lt.s32.totalorder %s21, 0
          %s182 = scalar_select %p181, %s21, 0
          %s183 = smul.addr %s180, 2
          %s184 = sadd.s32 %s182, %s183
          %s185 = smul.addr %s184, 4
          %s186 = scalar_lea.vmem %s0, %s185
        $region28: #{bottleneck_forward.7} parent=23 // pred_fallthru
          _
        // Predicated region
        $region29: #{bottleneck_forward.7} parent=23 // pred_check
          %p187 = pneg %p75
        $region30: #{bottleneck_forward.7} parent=23 // pred_check_branch
          %189 = sbr.rel (%p187) target = $region32
        $region31: #{bottleneck_forward.7} parent=23 // pred_region
          %p190 = scmp.lt.s32.totalorder %s20, 1
          %s191 = scalar_select %p190, %s20, 1
          %p192 = scmp.lt.s32.totalorder %s21, 0
          %s193 = scalar_select %p192, %s21, 0
          %s194 = smul.addr %s191, 2
          %s195 = sadd.s32 %s193, %s194
          %s196 = smul.addr %s195, 8
          %s197 = scalar_lea.vmem %s1, %s196
        $region32: #{bottleneck_forward.7} parent=23 // pred_fallthru
          _
      $region24: #{bottleneck_forward.7} parent=5 // pred_fallthru
        _
      %p198 = scmp.le.s32.totalorder 1, %s13
      %p199 = scmp.lt.s32.totalorder %s13, 3
      %p200 = pnand %p198, %p199
      %p201 = pneg %p200
      // Predicated region
      $region33: #{bottleneck_forward.7} parent=5 // pred_check
        _
      $region34: #{bottleneck_forward.7} parent=5 // pred_check_branch
        %203 = sbr.rel (%p200) target = $region36
      $region35: #{bottleneck_forward.7} parent=5 // pred_region
        %s204 = ssub.s32 %s13, 1
        %p205 = scmp.lt.s32.totalorder %s22, 1
        %s206 = scalar_select %p205, %s22, 1
        %p207 = scmp.lt.s32.totalorder %s23, 0
        %s208 = scalar_select %p207, %s23, 0
        %s209 = smul.addr %s206, 2
        %s210 = sadd.s32 %s208, %s209
        %s211 = smul.addr %s210, 4
        %s212 = scalar_lea.vmem %s0, %s211
        %p213 = pneg %p53
        %p214 = pneg %p50
        %p215 = scmp.lt.s32.totalorder %s22, 1
        %s216 = scalar_select %p215, %s22, 1
        %p217 = scmp.lt.s32.totalorder %s23, 0
        %s218 = scalar_select %p217, %s23, 0
        %s219 = smul.addr %s216, 2
        %s220 = sadd.s32 %s218, %s219
        %s221 = smul.addr %s220, 8
        %s222 = scalar_lea.vmem %s1, %s221
        %p223 = pneg %p81
        %p224 = pneg %p78
        %p225 = pneg %p102
        %p226 = pneg %p99
        %p227 = pneg %p123
        %p228 = pneg %p120
        %p229 = pneg %p151
        %p230 = pneg %p148
        %s231 = sand.u32 %s138, 1
        %s232 = scalar_lea.sflag [#allocation3], %s231
        %s233 = sand.u32 %s138, 1
        %s234 = smul.addr %s233, 16
        %s235 = scalar_lea.vmem [#allocation2], %s234
        %p236 = scmp.lt.s32.totalorder %s22, 1
        %s237 = scalar_select %p236, %s22, 1
        %p238 = scmp.lt.s32.totalorder %s23, 0
        %s239 = scalar_select %p238, %s23, 0
        %s240 = smul.addr %s237, 2
        %s241 = sadd.s32 %s239, %s240
        %s242 = smul.addr %s241, 4
        %s243 = scalar_lea.vmem %s0, %s242
        %p244 = scmp.lt.s32.totalorder %s22, 1
        %s245 = scalar_select %p244, %s22, 1
        %p246 = scmp.lt.s32.totalorder %s23, 0
        %s247 = scalar_select %p246, %s23, 0
        %s248 = smul.addr %s245, 2
        %s249 = sadd.s32 %s247, %s248
        %s250 = smul.addr %s249, 8
        %s251 = scalar_lea.vmem %s1, %s250
        %v252 = vld [vmem:[%s243] sm:$0xf]
        %v253 = vld [vmem:[%s243 + $0x4] sm:$0xf]
        %v254 = vunpack.c.l.bf16 %v252
        %v255 = vunpack.c.l.bf16 %v253
        %v256 = vld [vmem:[%s2] sm:$0xff]
        %v257 = vld [vmem:[%s2 + $0x8] sm:$0xff]
        %259 = vset.pattern.permute.xlu0 0
        %260 = vperm.xlu0 %259, %v256
        %v261 = vpop.permute.xlu0 %260
        %264 = vset.pattern.permute.xlu0 0
        %265 = vperm.xlu0 %264, %v257
        %v266 = vpop.permute.xlu0 %265
        %v268 = vmul.f32 %v254, %v261
        %v269 = vmul.f32 %v255, %v266
        %v270 = vld [vmem:[%s3] sm:$0xff]
        %v271 = vld [vmem:[%s3 + $0x8] sm:$0xff]
        %273 = vset.pattern.permute.xlu0 0
        %274 = vperm.xlu0 %273, %v270
        %v275 = vpop.permute.xlu0 %274
        %278 = vset.pattern.permute.xlu0 0
        %279 = vperm.xlu0 %278, %v271
        %v280 = vpop.permute.xlu0 %279
        %v282 = vadd.f32 %v268, %v275
        %v283 = vadd.f32 %v269, %v280
        %v284 = vld [vmem:[%s251] sm:$0xff]
        %v285 = vld [vmem:[%s251 + $0x8] sm:$0xff]
        %v286 = vadd.f32 %v282, %v284
        %v287 = vadd.f32 %v283, %v285
        %v288 = vmax.f32 %v286, 0.0
        %v289 = vmax.f32 %v287, 0.0
        %vm290 = vcmask 130048
        %291 = vst.msk [vmem:[%s235] sm:$0xff] %vm290, %v288
        %292 = vst.msk [vmem:[%s235 + $0x8] sm:$0xff] %vm290, %v289
        %s293 = sand.u32 %s138, 1
        %s294 = scalar_lea.sflag [#allocation3], %s293
        %s295 = sand.u32 %s138, 1
        %s296 = smul.addr %s295, 16
        %s297 = scalar_lea.vmem [#allocation2], %s296
        // Predicated region
        $region37: #{bottleneck_forward.7} parent=35 // pred_check
          %p298 = pneg %p148
        $region38: #{bottleneck_forward.7} parent=35 // pred_check_branch
          %300 = sbr.rel (%p298) target = $region40
        $region39: #{bottleneck_forward.7} parent=35 // pred_region
          %302 = vsyncadd %s294, 0
          %s303 = smul.addr %s22, 2
          %s304 = sadd.s32 %s23, %s303
          %s305 = smul.addr %s304, 8
          %s306 = scalar_lea.hbm %s4, %s305
          %s307 = sshll.u32 %s297, 4
          %s308 = int_to_ptr.vmem [resolvable:$true] %s307
          %s309 = sshll.u32 %s306, 4
          %s310 = int_to_ptr.hbm [resolvable:$true] %s309
          %315 = dma.vmem_to_hbm [thread:$0]  %s308, 256, %s310, %s294, 128, 128, 8
        $region40: #{bottleneck_forward.7} parent=35 // pred_fallthru
          _
      $region36: #{bottleneck_forward.7} parent=5 // pred_fallthru
        _
      %p316 = scmp.le.s32.totalorder 2, %s13
      // Predicated region
      $region41: #{bottleneck_forward.7} parent=5 // pred_check
        %p317 = pneg %p316
      $region42: #{bottleneck_forward.7} parent=5 // pred_check_branch
        %319 = sbr.rel (%p317) target = $region44
      $region43: #{bottleneck_forward.7} parent=5 // pred_region
        %s320 = ssub.s32 %s13, 2
        // Predicated region
        $region45: #{bottleneck_forward.7} parent=43 // pred_check
          %p321 = pneg %p154
        $region46: #{bottleneck_forward.7} parent=43 // pred_check_branch
          %323 = sbr.rel (%p321) target = $region48
        $region47: #{bottleneck_forward.7} parent=43 // pred_region
          %s324 = sand.u32 %s139, 1
          %s325 = scalar_lea.sflag [#allocation3], %s324
          %s326 = sand.u32 %s139, 1
          %s327 = smul.addr %s326, 16
          %s328 = scalar_lea.vmem [#allocation2], %s327
          %330 = dma.done %s325, 256
        $region48: #{bottleneck_forward.7} parent=43 // pred_fallthru
          _
      $region44: #{bottleneck_forward.7} parent=5 // pred_fallthru
        _
    $region6: #{bottleneck_forward.7} parent=1 // loop_footer
      %s17 = sadd.s32 1, %s13
    $region7: #{bottleneck_forward.7} parent=1 // loop_footer_branch
      %12 = sbr.rel target = $region3
    $region8: #{bottleneck_forward.7} parent=1 // loop_exit
      _
    %331 = vsyncpa [#allocation3], 1
    %s332 = scalar_lea.sflag [#allocation3], 1
    %333 = vsyncpa %s332, 1

</llo_original>
